<compile_context>
chip_gen: v6e
topology: v6e:2x2x1
jax: 0.10.0
libtpu: 0.0.40
codegen_flags: <defaults>
</compile_context>

<pallas_src>
import numpy as np
import jax
import jax.numpy as jnp
from jax.experimental import pallas as pl
from jax.experimental.pallas import tpu as pltpu

# ---------------------------------------------------------------------------
# Static configuration (small fixed graph, shared topology across the batch).
# ---------------------------------------------------------------------------
N_NODES = 8
E_EDGES = N_NODES * (N_NODES - 1)        # fully connected, no self loops -> 56
COORD_DIM = 3
INPUT_NF = 32
OUTPUT_NF = 32
HIDDEN = 32
COORDS_WEIGHT = 1.0
GRAPHS_PER_BLOCK = 4                     # graphs packed per grid step

# Set to jnp.bfloat16 on v6e/v7x for ~2x MXU rate (then loosen test tolerances).
MXU_DTYPE = jnp.float32

# ---------------------------------------------------------------------------
# Packed parameter layout: one (PARAM_ROWS, PARAM_COLS) f32 slab.
# All row offsets are multiples of 8 so in-kernel ref slices stay sublane-aligned.
# ---------------------------------------------------------------------------
PARAM_COLS = 3 * HIDDEN                  # 96
_R_A = 0                                  # (INPUT_NF, 3H): [W_e1_src | W_e1_tgt | W_n1_h]
_R_WE2 = _R_A + INPUT_NF                  # 32  : W_e2   (H, H)
_R_WC1 = _R_WE2 + HIDDEN                  # 64  : W_c1   (H, H)
_R_WN1A = _R_WC1 + HIDDEN                 # 96  : W_n1_agg (H, H)
_R_WN2 = _R_WN1A + HIDDEN                 # 128 : W_n2   (H, OUT)
_R_WC2 = _R_WN2 + HIDDEN                  # 160 : W_c2   (H, 1)
_R_WRAD = _R_WC2 + HIDDEN                 # 192 : radial row of W_e1 (1, H)
_R_BE1 = _R_WRAD + 8                      # 200
_R_BE2 = _R_BE1 + 8                       # 208
_R_BC1 = _R_BE2 + 8                       # 216
_R_BN1 = _R_BC1 + 8                       # 224
_R_BN2 = _R_BN1 + 8                       # 232
PARAM_ROWS = _R_BN2 + 8                   # 240


def _egcl_kernel(gather_ref, scatter_ref, p_ref, h_ref, coord_ref, out_ref):
    """One block of GB graphs per grid step.

    Refs: gather (GE, 2*GN) MXU_DTYPE, scatter (GN, GE) MXU_DTYPE,
    p (PARAM_ROWS, PARAM_COLS) f32, h (GN, IN) f32, coord (GN, 3) f32,
    out (GN, OUT+3) f32 (= [h_new | coord_new]), where GN = GB*N, GE = GB*E.
    """
    f32 = jnp.float32
    IN, H, OUT = INPUT_NF, HIDDEN, OUTPUT_NF

    h = h_ref[...]                                   # (GN, IN)
    coord = coord_ref[...]                           # (GN, 3)
    gather = gather_ref[...]                         # (GE, 2*GN) block-diag one-hot
    scatter = scatter_ref[...]                       # (GN, GE)   block-diag one-hot
    GE = gather.shape[0]

    # --- packed parameters (static, aligned ref slices) ---------------------
    A = p_ref[_R_A:_R_A + IN, 0:3 * H]               # (IN, 3H)
    w_e2 = p_ref[_R_WE2:_R_WE2 + H, 0:H]
    w_c1 = p_ref[_R_WC1:_R_WC1 + H, 0:H]
    w_n1a = p_ref[_R_WN1A:_R_WN1A + H, 0:H]
    w_n2 = p_ref[_R_WN2:_R_WN2 + H, 0:OUT]
    w_c2 = p_ref[_R_WC2:_R_WC2 + H, 0:1]
    w_rad = p_ref[_R_WRAD:_R_WRAD + 1, 0:H]
    b_e1 = p_ref[_R_BE1:_R_BE1 + 1, 0:H]
    b_e2 = p_ref[_R_BE2:_R_BE2 + 1, 0:H]
    b_c1 = p_ref[_R_BC1:_R_BC1 + 1, 0:H]
    b_n1 = p_ref[_R_BN1:_R_BN1 + 1, 0:H]
    b_n2 = p_ref[_R_BN2:_R_BN2 + 1, 0:OUT]

    # --- project-then-gather (edge-MLP layer 1 h-part + coord_diff fused) ---
    hp = jnp.dot(h.astype(MXU_DTYPE), A.astype(MXU_DTYPE),
                 preferred_element_type=f32)          # (GN, 3H)
    m_src = jnp.concatenate([hp[:, 0:H], coord], axis=1)          # (GN, H+3)
    m_tgt = jnp.concatenate([hp[:, H:2 * H], -coord], axis=1)     # (GN, H+3)
    m = jnp.concatenate([m_src, m_tgt], axis=0)                   # (2*GN, H+3)
    g = jnp.dot(gather, m.astype(MXU_DTYPE),
                preferred_element_type=f32)           # (GE, H+3)
    e1_h = g[:, 0:H]                                  # W_src^T h[row] + W_tgt^T h[col]
    coord_diff = g[:, H:H + 3]                        # coord[row] - coord[col]
    radial = jnp.sum(coord_diff * coord_diff, axis=1, keepdims=True)   # (GE, 1)

    # --- edge_model: Linear(2*IN+1, H) -> ReLU -> Linear(H, H) -> ReLU -------
    e1 = jnp.maximum(e1_h + radial * w_rad + b_e1, 0.0)            # (GE, H)
    edge_feat = jnp.maximum(
        jnp.dot(e1.astype(MXU_DTYPE), w_e2.astype(MXU_DTYPE),
                preferred_element_type=f32) + b_e2, 0.0)           # (GE, H)

    # --- coord_model: Linear(H, H) -> ReLU -> Linear(H, 1, no bias) ----------
    c1 = jnp.maximum(
        jnp.dot(edge_feat.astype(MXU_DTYPE), w_c1.astype(MXU_DTYPE),
                preferred_element_type=f32) + b_c1, 0.0)           # (GE, H)
    cscal = jnp.dot(c1.astype(MXU_DTYPE), w_c2.astype(MXU_DTYPE),
                    preferred_element_type=f32)                    # (GE, 1)
    # einsum('bij,bci->bcj') with num_vectors_in = num_vectors_out = 1;
    # the module clamps unconditionally.
    trans = jnp.clip(coord_diff * cscal, -100.0, 100.0)            # (GE, 3)

    # --- fused scatter: segment_sum(edge_feat), segment_sum(trans), count ----
    src = jnp.concatenate([edge_feat, trans, jnp.ones((GE, 1), f32)], axis=1)  # (GE, H+4)
    scat = jnp.dot(scatter, src.astype(MXU_DTYPE),
                   preferred_element_type=f32)                     # (GN, H+4)
    agg = scat[:, 0:H]                                             # sum of edge_feat
    seg_sum = scat[:, H:H + 3]                                     # sum of trans
    count = scat[:, H + 3:H + 4]
    agg_mean = seg_sum / jnp.maximum(count, 1.0)
    coord_new = coord + agg_mean * COORDS_WEIGHT                   # (GN, 3)

    # --- node_model: Linear(H+IN, H) -> ReLU -> Linear(H, OUT), recurrent ----
    n1 = jnp.maximum(
        hp[:, 2 * H:3 * H]                                          # h @ W_n1[:IN]
        + jnp.dot(agg.astype(MXU_DTYPE), w_n1a.astype(MXU_DTYPE),
                  preferred_element_type=f32)
        + b_n1, 0.0)                                                # (GN, H)
    h_new = h + (jnp.dot(n1.astype(MXU_DTYPE), w_n2.astype(MXU_DTYPE),
                         preferred_element_type=f32) + b_n2)        # (GN, OUT)

    # --- single lane-packed store: [h_new | coord_new] -----------------------
    out_ref[...] = jnp.concatenate([h_new, coord_new], axis=1).astype(out_ref.dtype)


def pack_params(p):
    """Pack all weights/biases into one (PARAM_ROWS, PARAM_COLS) f32 slab."""
    IN, H, OUT = INPUT_NF, HIDDEN, OUTPUT_NF
    pk = jnp.zeros((PARAM_ROWS, PARAM_COLS), jnp.float32)
    w_e1 = p["w_e1"]                                  # (2*IN+1, H)
    pk = pk.at[_R_A:_R_A + IN, 0:H].set(w_e1[:IN])
    pk = pk.at[_R_A:_R_A + IN, H:2 * H].set(w_e1[IN:2 * IN])
    pk = pk.at[_R_A:_R_A + IN, 2 * H:3 * H].set(p["w_n1"][:IN])
    pk = pk.at[_R_WE2:_R_WE2 + H, 0:H].set(p["w_e2"])
    pk = pk.at[_R_WC1:_R_WC1 + H, 0:H].set(p["w_c1"])
    pk = pk.at[_R_WN1A:_R_WN1A + H, 0:H].set(p["w_n1"][IN:])
    pk = pk.at[_R_WN2:_R_WN2 + H, 0:OUT].set(p["w_n2"])
    pk = pk.at[_R_WC2:_R_WC2 + H, 0:1].set(p["w_c2"])
    pk = pk.at[_R_WRAD, 0:H].set(w_e1[2 * IN])
    pk = pk.at[_R_BE1, 0:H].set(p["b_e1"][0])
    pk = pk.at[_R_BE2, 0:H].set(p["b_e2"][0])
    pk = pk.at[_R_BC1, 0:H].set(p["b_c1"][0])
    pk = pk.at[_R_BN1, 0:H].set(p["b_n1"][0])
    pk = pk.at[_R_BN2, 0:OUT].set(p["b_n2"][0])
    return pk


@jax.jit
def egcl_forward(h, edge_index, coord, params, edge_attr=None, node_attr=None):
    """Batched E_GCL.forward.

    h: (B, N, INPUT_NF), coord: (B, N, 3); edge_index = (row, col), each (E,),
    shared topology across the batch.  Returns (h_new (B,N,OUT),
    coord_new (B,N,3,1), edge_attr).
    """
    # TODO(synk): edge_attr / node_attr / attention / tanh / norm_diff branches
    # not exercised (module defaults: edges_in_d=0, nodes_att_dim=0,
    # attention=False, tanh=False, norm_diff=False).
    row, col = edge_index
    B, N, _ = h.shape
    E = int(row.shape[0])
    GB = GRAPHS_PER_BLOCK
    assert B % GB == 0, "batch must be a multiple of GRAPHS_PER_BLOCK"
    GN, GE = GB * N, GB * E

    # --- one-hot gather / scatter matrices, built ONCE (shared topology) -----
    node_lane = jnp.arange(N, dtype=jnp.int32)[None, :]
    oh_row = (row.astype(jnp.int32)[:, None] == node_lane).astype(jnp.float32)   # (E, N)
    oh_col = (col.astype(jnp.int32)[:, None] == node_lane).astype(jnp.float32)   # (E, N)
    eye_gb = jnp.eye(GB, dtype=jnp.float32)
    gather_bd = jnp.concatenate(
        [jnp.kron(eye_gb, oh_row), jnp.kron(eye_gb, oh_col)], axis=1
    ).astype(MXU_DTYPE)                                                          # (GE, 2*GN)
    scatter_bd = jnp.kron(eye_gb, oh_row.T).astype(MXU_DTYPE)                    # (GN, GE)

    p_packed = pack_params(params)                                               # (240, 96)

    h_blk = h.astype(jnp.float32).reshape(B // GB, GN, INPUT_NF)
    c_blk = coord.astype(jnp.float32).reshape(B // GB, GN, COORD_DIM)

    out = pl.pallas_call(
        _egcl_kernel,
        out_shape=jax.ShapeDtypeStruct((B // GB, GN, OUTPUT_NF + COORD_DIM),
                                       jnp.float32),
        grid=(B // GB,),
        in_specs=[
            pl.BlockSpec((GE, 2 * GN), lambda g: (0, 0)),          # shared one-hots
            pl.BlockSpec((GN, GE), lambda g: (0, 0)),
            pl.BlockSpec((PARAM_ROWS, PARAM_COLS), lambda g: (0, 0)),
            pl.BlockSpec((None, GN, INPUT_NF), lambda g: (g, 0, 0)),
            pl.BlockSpec((None, GN, COORD_DIM), lambda g: (g, 0, 0)),
        ],
        out_specs=pl.BlockSpec((None, GN, OUTPUT_NF + COORD_DIM),
                               lambda g: (g, 0, 0)),
        compiler_params=pltpu.CompilerParams(
            dimension_semantics=("parallel",)),
    )(gather_bd, scatter_bd, p_packed, h_blk, c_blk)

    out = out.reshape(B, N, OUTPUT_NF + COORD_DIM)
    h_new = out[:, :, :OUTPUT_NF]
    coord_new = out[:, :, OUTPUT_NF:]
    # PyTorch coord_model returns coord with trailing num_vectors_out axis.
    return h_new, coord_new[..., None], edge_attr


def init_params(key):
    def linear(k, fan_in, fan_out):
        kw, kb = jax.random.split(k)
        bound = 1.0 / np.sqrt(fan_in)
        w = jax.random.uniform(kw, (fan_in, fan_out), jnp.float32, -bound, bound)
        b = jax.random.uniform(kb, (1, fan_out), jnp.float32, -bound, bound)
        return w, b

    keys = jax.random.split(key, 6)
    w_e1, b_e1 = linear(keys[0], 2 * INPUT_NF + 1, HIDDEN)
    w_e2, b_e2 = linear(keys[1], HIDDEN, HIDDEN)
    w_c1, b_c1 = linear(keys[2], HIDDEN, HIDDEN)
    # final coord layer: xavier_uniform(gain=0.001), no bias
    xb = 0.001 * np.sqrt(6.0 / (HIDDEN + 1))
    w_c2 = jax.random.uniform(keys[3], (HIDDEN, 1), jnp.float32, -xb, xb)
    w_n1, b_n1 = linear(keys[4], HIDDEN + INPUT_NF, HIDDEN)
    w_n2, b_n2 = linear(keys[5], HIDDEN, OUTPUT_NF)
    return dict(w_e1=w_e1, b_e1=b_e1, w_e2=w_e2, b_e2=b_e2,
                w_c1=w_c1, b_c1=b_c1, w_c2=w_c2,
                w_n1=w_n1, b_n1=b_n1, w_n2=w_n2, b_n2=b_n2)


def ref_forward(h, edge_index, coord, p):
    """Pure-JAX single-graph reference mirroring the PyTorch module exactly."""
    row, col = edge_index
    coord_diff = coord[row] - coord[col]
    radial = jnp.sum(coord_diff ** 2, axis=1, keepdims=True)
    e_in = jnp.concatenate([h[row], h[col], radial], axis=1)
    e1 = jax.nn.relu(e_in @ p["w_e1"] + p["b_e1"])
    edge_feat = jax.nn.relu(e1 @ p["w_e2"] + p["b_e2"])
    c1 = jax.nn.relu(edge_feat @ p["w_c1"] + p["b_c1"])
    cscal = c1 @ p["w_c2"]
    trans = jnp.clip(coord_diff * cscal, -100.0, 100.0)
    N = h.shape[0]
    seg_sum = jnp.zeros((N, COORD_DIM), jnp.float32).at[row].add(trans)
    count = jnp.zeros((N, 1), jnp.float32).at[row].add(1.0)
    agg_mean = seg_sum / jnp.maximum(count, 1.0)
    coord_new = coord[:, :, None] + (agg_mean * COORDS_WEIGHT)[:, :, None]
    agg = jnp.zeros((N, HIDDEN), jnp.float32).at[row].add(edge_feat)
    n_in = jnp.concatenate([h, agg], axis=1)
    n1 = jax.nn.relu(n_in @ p["w_n1"] + p["b_n1"])
    h_new = h + (n1 @ p["w_n2"] + p["b_n2"])
    return h_new, coord_new


if __name__ == "__main__":
    key = jax.random.PRNGKey(0)
    k_p, k_h, k_c = jax.random.split(key, 3)

    B = 8                                            # 2 grid steps of 4 graphs
    params = init_params(k_p)

    # fully-connected graph, no self-loops: E = N * (N - 1) = 56
    rows, cols = [], []
    for i in range(N_NODES):
        for j in range(N_NODES):
            if i != j:
                rows.append(i)
                cols.append(j)
    edge_index = (jnp.asarray(rows, dtype=jnp.int32),
                  jnp.asarray(cols, dtype=jnp.int32))

    h = jax.random.normal(k_h, (B, N_NODES, INPUT_NF), jnp.float32)
    coord = jax.random.normal(k_c, (B, N_NODES, COORD_DIM), jnp.float32)

    h_new, coord_new, _ = egcl_forward(h, edge_index, coord, params)
    h_new = jax.block_until_ready(h_new)
    coord_new = jax.block_until_ready(coord_new)

    # reference, vmapped over the batch (shared topology / params)
    ref_fn = jax.vmap(lambda hh, cc: ref_forward(hh, edge_index, cc, params))
    h_ref, coord_ref = ref_fn(h, coord)

    np.testing.assert_allclose(np.asarray(h_new), np.asarray(h_ref),
                               rtol=1e-4, atol=1e-4)
    np.testing.assert_allclose(np.asarray(coord_new), np.asarray(coord_ref),
                               rtol=1e-4, atol=1e-4)

    print("KERNEL_OK")
</pallas_src>

<mosaic_0001>
module attributes {stable_mosaic.version = 11 : i64} {
  func.func @_egcl_kernel(%arg0: i32, %arg1: memref<224x64xf32, #tpu.memory_space<vmem>>, %arg2: memref<32x224xf32, #tpu.memory_space<vmem>>, %arg3: memref<240x96xf32, #tpu.memory_space<vmem>>, %arg4: memref<1x32x32xf32, #tpu.memory_space<vmem>>, %arg5: memref<1x32x3xf32, #tpu.memory_space<vmem>>, %arg6: memref<1x32x35xf32, #tpu.memory_space<vmem>>) attributes {dimension_semantics = [#tpu.dimension_semantics<parallel>], iteration_bounds = array<i64: 2>, scalar_prefetch = 0 : i64, scratch_operands = 0 : i64, tpu.core_type = #tpu.core_type<tc>, window_params = [{pipeline_mode = #tpu.pipeline_mode<synchronous>, transform_indices = @transform_0, window_bounds = array<i64: 224, 64>}, {pipeline_mode = #tpu.pipeline_mode<synchronous>, transform_indices = @transform_1, window_bounds = array<i64: 32, 224>}, {pipeline_mode = #tpu.pipeline_mode<synchronous>, transform_indices = @transform_2, window_bounds = array<i64: 240, 96>}, {transform_indices = @transform_3, window_bounds = array<i64: 1, 32, 32>}, {transform_indices = @transform_4, window_bounds = array<i64: 1, 32, 3>}, {transform_indices = @transform_5, window_bounds = array<i64: 1, 32, 35>}]} {
    %c0 = arith.constant 0 : index
    %c0_0 = arith.constant 0 : index
    %c0_1 = arith.constant 0 : index
    %0 = vector.load %arg4[%c0, %c0_0, %c0_1] : memref<1x32x32xf32, #tpu.memory_space<vmem>>, vector<1x32x32xf32>
    %1 = vector.shape_cast %0 : vector<1x32x32xf32> to vector<32x32xf32>
    %c0_2 = arith.constant 0 : index
    %c0_3 = arith.constant 0 : index
    %c0_4 = arith.constant 0 : index
    %2 = vector.load %arg5[%c0_2, %c0_3, %c0_4] : memref<1x32x3xf32, #tpu.memory_space<vmem>>, vector<1x32x3xf32>
    %3 = vector.shape_cast %2 : vector<1x32x3xf32> to vector<32x3xf32>
    %c0_5 = arith.constant 0 : index
    %c0_6 = arith.constant 0 : index
    %4 = vector.load %arg1[%c0_5, %c0_6] : memref<224x64xf32, #tpu.memory_space<vmem>>, vector<224x64xf32>
    %c0_7 = arith.constant 0 : index
    %c0_8 = arith.constant 0 : index
    %5 = vector.load %arg2[%c0_7, %c0_8] : memref<32x224xf32, #tpu.memory_space<vmem>>, vector<32x224xf32>
    %c0_9 = arith.constant 0 : index
    %c0_10 = arith.constant 0 : index
    %6 = vector.load %arg3[%c0_9, %c0_10] : memref<240x96xf32, #tpu.memory_space<vmem>>, vector<32x96xf32>
    %c32 = arith.constant 32 : index
    %c0_11 = arith.constant 0 : index
    %7 = vector.load %arg3[%c32, %c0_11] : memref<240x96xf32, #tpu.memory_space<vmem>>, vector<32x32xf32>
    %c64 = arith.constant 64 : index
    %c0_12 = arith.constant 0 : index
    %8 = vector.load %arg3[%c64, %c0_12] : memref<240x96xf32, #tpu.memory_space<vmem>>, vector<32x32xf32>
    %c96 = arith.constant 96 : index
    %c0_13 = arith.constant 0 : index
    %9 = vector.load %arg3[%c96, %c0_13] : memref<240x96xf32, #tpu.memory_space<vmem>>, vector<32x32xf32>
    %c128 = arith.constant 128 : index
    %c0_14 = arith.constant 0 : index
    %10 = vector.load %arg3[%c128, %c0_14] : memref<240x96xf32, #tpu.memory_space<vmem>>, vector<32x32xf32>
    %c160 = arith.constant 160 : index
    %c0_15 = arith.constant 0 : index
    %11 = vector.load %arg3[%c160, %c0_15] : memref<240x96xf32, #tpu.memory_space<vmem>>, vector<32x1xf32>
    %c192 = arith.constant 192 : index
    %c0_16 = arith.constant 0 : index
    %12 = vector.load %arg3[%c192, %c0_16] : memref<240x96xf32, #tpu.memory_space<vmem>>, vector<1x32xf32>
    %c200 = arith.constant 200 : index
    %c0_17 = arith.constant 0 : index
    %13 = vector.load %arg3[%c200, %c0_17] : memref<240x96xf32, #tpu.memory_space<vmem>>, vector<1x32xf32>
    %c208 = arith.constant 208 : index
    %c0_18 = arith.constant 0 : index
    %14 = vector.load %arg3[%c208, %c0_18] : memref<240x96xf32, #tpu.memory_space<vmem>>, vector<1x32xf32>
    %c216 = arith.constant 216 : index
    %c0_19 = arith.constant 0 : index
    %15 = vector.load %arg3[%c216, %c0_19] : memref<240x96xf32, #tpu.memory_space<vmem>>, vector<1x32xf32>
    %c224 = arith.constant 224 : index
    %c0_20 = arith.constant 0 : index
    %16 = vector.load %arg3[%c224, %c0_20] : memref<240x96xf32, #tpu.memory_space<vmem>>, vector<1x32xf32>
    %c232 = arith.constant 232 : index
    %c0_21 = arith.constant 0 : index
    %17 = vector.load %arg3[%c232, %c0_21] : memref<240x96xf32, #tpu.memory_space<vmem>>, vector<1x32xf32>
    %cst = arith.constant dense<0.000000e+00> : vector<32x96xf32>
    %18 = tpu.matmul %1, %6, %cst {dimension_numbers = #tpu.dot_dimension_numbers<[1], [0], [0], [1], [0, 0, 1, 1], [], []>} : vector<32x32xf32>, vector<32x96xf32>, vector<32x96xf32> -> vector<32x96xf32>
    %19 = vector.extract_strided_slice %18 {offsets = [0, 0], sizes = [32, 32], strides = [1, 1]} : vector<32x96xf32> to vector<32x32xf32>
    %20 = tpu.concatenate %19, %3 in 1 : vector<32x32xf32>, vector<32x3xf32> -> vector<32x35xf32>
    %21 = vector.extract_strided_slice %18 {offsets = [0, 32], sizes = [32, 32], strides = [1, 1]} : vector<32x96xf32> to vector<32x32xf32>
    %cst_22 = arith.constant 0.000000e+00 : f32
    %22 = vector.broadcast %cst_22 : f32 to vector<32x3xf32>
    %23 = arith.subf %22, %3 : vector<32x3xf32>
    %24 = tpu.concatenate %21, %23 in 1 : vector<32x32xf32>, vector<32x3xf32> -> vector<32x35xf32>
    %25 = tpu.concatenate %20, %24 in 0 : vector<32x35xf32>, vector<32x35xf32> -> vector<64x35xf32>
    %cst_23 = arith.constant dense<0.000000e+00> : vector<224x35xf32>
    %26 = tpu.matmul %4, %25, %cst_23 {dimension_numbers = #tpu.dot_dimension_numbers<[1], [0], [0], [1], [0, 0, 1, 1], [], []>} : vector<224x64xf32>, vector<64x35xf32>, vector<224x35xf32> -> vector<224x35xf32>
    %27 = vector.extract_strided_slice %26 {offsets = [0, 0], sizes = [224, 32], strides = [1, 1]} : vector<224x35xf32> to vector<224x32xf32>
    %28 = vector.extract_strided_slice %26 {offsets = [0, 32], sizes = [224, 3], strides = [1, 1]} : vector<224x35xf32> to vector<224x3xf32>
    %29 = arith.mulf %28, %28 : vector<224x3xf32>
    %cst_24 = arith.constant dense<0.000000e+00> : vector<224xf32>
    %30 = vector.multi_reduction <add>, %29, %cst_24 [1] : vector<224x3xf32> to vector<224xf32>
    %31 = vector.shape_cast %30 : vector<224xf32> to vector<224x1xf32>
    %32 = vector.broadcast %31 : vector<224x1xf32> to vector<224x32xf32>
    %33 = vector.broadcast %12 : vector<1x32xf32> to vector<224x32xf32>
    %34 = arith.mulf %32, %33 : vector<224x32xf32>
    %35 = arith.addf %27, %34 : vector<224x32xf32>
    %36 = vector.broadcast %13 : vector<1x32xf32> to vector<224x32xf32>
    %37 = arith.addf %35, %36 : vector<224x32xf32>
    %cst_25 = arith.constant 0.000000e+00 : f32
    %38 = vector.broadcast %cst_25 : f32 to vector<224x32xf32>
    %39 = arith.maximumf %37, %38 : vector<224x32xf32>
    %cst_26 = arith.constant dense<0.000000e+00> : vector<224x32xf32>
    %40 = tpu.matmul %39, %7, %cst_26 {dimension_numbers = #tpu.dot_dimension_numbers<[1], [0], [0], [1], [0, 0, 1, 1], [], []>} : vector<224x32xf32>, vector<32x32xf32>, vector<224x32xf32> -> vector<224x32xf32>
    %41 = vector.broadcast %14 : vector<1x32xf32> to vector<224x32xf32>
    %42 = arith.addf %40, %41 : vector<224x32xf32>
    %cst_27 = arith.constant 0.000000e+00 : f32
    %43 = vector.broadcast %cst_27 : f32 to vector<224x32xf32>
    %44 = arith.maximumf %42, %43 : vector<224x32xf32>
    %cst_28 = arith.constant dense<0.000000e+00> : vector<224x32xf32>
    %45 = tpu.matmul %44, %8, %cst_28 {dimension_numbers = #tpu.dot_dimension_numbers<[1], [0], [0], [1], [0, 0, 1, 1], [], []>} : vector<224x32xf32>, vector<32x32xf32>, vector<224x32xf32> -> vector<224x32xf32>
    %46 = vector.broadcast %15 : vector<1x32xf32> to vector<224x32xf32>
    %47 = arith.addf %45, %46 : vector<224x32xf32>
    %cst_29 = arith.constant 0.000000e+00 : f32
    %48 = vector.broadcast %cst_29 : f32 to vector<224x32xf32>
    %49 = arith.maximumf %47, %48 : vector<224x32xf32>
    %cst_30 = arith.constant dense<0.000000e+00> : vector<224x1xf32>
    %50 = tpu.matmul %49, %11, %cst_30 {dimension_numbers = #tpu.dot_dimension_numbers<[1], [0], [0], [1], [0, 0, 1, 1], [], []>} : vector<224x32xf32>, vector<32x1xf32>, vector<224x1xf32> -> vector<224x1xf32>
    %51 = vector.broadcast %50 : vector<224x1xf32> to vector<224x3xf32>
    %52 = arith.mulf %28, %51 : vector<224x3xf32>
    %cst_31 = arith.constant -1.000000e+02 : f32
    %cst_32 = arith.constant 1.000000e+02 : f32
    %53 = vector.broadcast %cst_31 : f32 to vector<224x3xf32>
    %54 = arith.maximumf %53, %52 : vector<224x3xf32>
    %55 = vector.broadcast %cst_32 : f32 to vector<224x3xf32>
    %56 = arith.minimumf %55, %54 : vector<224x3xf32>
    %cst_33 = arith.constant 1.000000e+00 : f32
    %57 = vector.broadcast %cst_33 : f32 to vector<224x1xf32>
    %58 = tpu.concatenate %44, %56, %57 in 1 : vector<224x32xf32>, vector<224x3xf32>, vector<224x1xf32> -> vector<224x36xf32>
    %cst_34 = arith.constant dense<0.000000e+00> : vector<32x36xf32>
    %59 = tpu.matmul %5, %58, %cst_34 {dimension_numbers = #tpu.dot_dimension_numbers<[1], [0], [0], [1], [0, 0, 1, 1], [], []>} : vector<32x224xf32>, vector<224x36xf32>, vector<32x36xf32> -> vector<32x36xf32>
    %60 = vector.extract_strided_slice %59 {offsets = [0, 0], sizes = [32, 32], strides = [1, 1]} : vector<32x36xf32> to vector<32x32xf32>
    %61 = vector.extract_strided_slice %59 {offsets = [0, 32], sizes = [32, 3], strides = [1, 1]} : vector<32x36xf32> to vector<32x3xf32>
    %62 = vector.extract_strided_slice %59 {offsets = [0, 35], sizes = [32, 1], strides = [1, 1]} : vector<32x36xf32> to vector<32x1xf32>
    %cst_35 = arith.constant 1.000000e+00 : f32
    %63 = vector.broadcast %cst_35 : f32 to vector<32x1xf32>
    %64 = arith.maximumf %62, %63 : vector<32x1xf32>
    %65 = vector.broadcast %64 : vector<32x1xf32> to vector<32x3xf32>
    %66 = arith.divf %61, %65 : vector<32x3xf32>
    %cst_36 = arith.constant 1.000000e+00 : f32
    %67 = vector.broadcast %cst_36 : f32 to vector<32x3xf32>
    %68 = arith.mulf %66, %67 : vector<32x3xf32>
    %69 = arith.addf %3, %68 : vector<32x3xf32>
    %70 = vector.extract_strided_slice %18 {offsets = [0, 64], sizes = [32, 32], strides = [1, 1]} : vector<32x96xf32> to vector<32x32xf32>
    %cst_37 = arith.constant dense<0.000000e+00> : vector<32x32xf32>
    %71 = tpu.matmul %60, %9, %cst_37 {dimension_numbers = #tpu.dot_dimension_numbers<[1], [0], [0], [1], [0, 0, 1, 1], [], []>} : vector<32x32xf32>, vector<32x32xf32>, vector<32x32xf32> -> vector<32x32xf32>
    %72 = arith.addf %70, %71 : vector<32x32xf32>
    %73 = vector.broadcast %16 : vector<1x32xf32> to vector<32x32xf32>
    %74 = arith.addf %72, %73 : vector<32x32xf32>
    %cst_38 = arith.constant 0.000000e+00 : f32
    %75 = vector.broadcast %cst_38 : f32 to vector<32x32xf32>
    %76 = arith.maximumf %74, %75 : vector<32x32xf32>
    %cst_39 = arith.constant dense<0.000000e+00> : vector<32x32xf32>
    %77 = tpu.matmul %76, %10, %cst_39 {dimension_numbers = #tpu.dot_dimension_numbers<[1], [0], [0], [1], [0, 0, 1, 1], [], []>} : vector<32x32xf32>, vector<32x32xf32>, vector<32x32xf32> -> vector<32x32xf32>
    %78 = vector.broadcast %17 : vector<1x32xf32> to vector<32x32xf32>
    %79 = arith.addf %77, %78 : vector<32x32xf32>
    %80 = arith.addf %1, %79 : vector<32x32xf32>
    %81 = tpu.concatenate %80, %69 in 1 : vector<32x32xf32>, vector<32x3xf32> -> vector<32x35xf32>
    %c0_40 = arith.constant 0 : index
    %c0_41 = arith.constant 0 : index
    %c0_42 = arith.constant 0 : index
    %82 = vector.load %arg6[%c0_40, %c0_41, %c0_42] : memref<1x32x35xf32, #tpu.memory_space<vmem>>, vector<1x32x35xf32>
    %83 = vector.shape_cast %82 : vector<1x32x35xf32> to vector<32x35xf32>
    %84 = vector.shape_cast %81 : vector<32x35xf32> to vector<1x32x35xf32>
    tpu.vector_store %arg6[%c0_40, %c0_41, %c0_42], %84 {strides = array<i32>} : memref<1x32x35xf32, #tpu.memory_space<vmem>>, vector<1x32x35xf32>,
    return
  }
  func.func @transform_0(%arg0: i32) -> (i32, i32) {
    %c0_i32 = arith.constant 0 : i32
    %c0_i32_0 = arith.constant 0 : i32
    %c0_i32_1 = arith.constant 0 : i32
    return %c0_i32, %c0_i32_0 : i32, i32
  }
  func.func @transform_1(%arg0: i32) -> (i32, i32) {
    %c0_i32 = arith.constant 0 : i32
    %c0_i32_0 = arith.constant 0 : i32
    %c0_i32_1 = arith.constant 0 : i32
    return %c0_i32, %c0_i32_0 : i32, i32
  }
  func.func @transform_2(%arg0: i32) -> (i32, i32) {
    %c0_i32 = arith.constant 0 : i32
    %c0_i32_0 = arith.constant 0 : i32
    %c0_i32_1 = arith.constant 0 : i32
    return %c0_i32, %c0_i32_0 : i32, i32
  }
  func.func @transform_3(%arg0: i32) -> (i32, i32, i32) {
    %c0_i32 = arith.constant 0 : i32
    %c0_i32_0 = arith.constant 0 : i32
    %c0_i32_1 = arith.constant 0 : i32
    return %arg0, %c0_i32, %c0_i32_0 : i32, i32, i32
  }
  func.func @transform_4(%arg0: i32) -> (i32, i32, i32) {
    %c0_i32 = arith.constant 0 : i32
    %c0_i32_0 = arith.constant 0 : i32
    %c0_i32_1 = arith.constant 0 : i32
    return %arg0, %c0_i32, %c0_i32_0 : i32, i32, i32
  }
  func.func @transform_5(%arg0: i32) -> (i32, i32, i32) {
    %c0_i32 = arith.constant 0 : i32
    %c0_i32_0 = arith.constant 0 : i32
    %c0_i32_1 = arith.constant 0 : i32
    return %arg0, %c0_i32, %c0_i32_0 : i32, i32, i32
  }
}

</mosaic_0001>

<llo_original>
// kernel: egcl_forward.1
$region0: #{egcl_forward.1}
  #allocation0 [shape = 'u32[]', space=smem, size = 0x4, offset = 0x4, fixed_abs, tag = 'smem constant byte address 0x4 - core index']
  #allocation1 [shape = 'u32[144,128]{1,0:T(1,128)}', space=vmem, size = 0x12000, scoped, tag = 'internal scratch']
  %s0 = inlined_call_operand.vmem [shape: f32[224,64], index: 0, kind: input, shape index: {}]
  %s1 = inlined_call_operand.vmem [shape: f32[32,224], index: 1, kind: input, shape index: {}]
  %s2 = inlined_call_operand.vmem [shape: f32[240,96], index: 2, kind: input, shape index: {}]
  %s3 = inlined_call_operand.vmem [shape: f32[2,32,32], index: 3, kind: input, shape index: {}]
  %s4 = inlined_call_operand.vmem [shape: f32[2,32,3], index: 4, kind: input, shape index: {}]
  %s5 = inlined_call_operand.vmem [shape: f32[2,32,35], index: 5, kind: output, shape index: {}]
  %s6 = sld [smem:[#allocation0]]
  $region53: #{egcl_forward.1} parent=0
    _
  %s8 = ssub.s32 1, %s6
  %s9 = scalar_select 0, %s8, %s6
  loop: start=0, step=1, limit=4
  $region2: #{egcl_forward.1} parent=0 // loop_pre_header
    _
  $region3: #{egcl_forward.1} parent=0 // loop_header
    %s11 = sphi 0, %s15
    %p12 = scmp.ge.s32.totalorder %s11, 4
    %s19 = sphi 0, %s19
    %s21 = sphi 0, %s19
    %s22 = sphi 0, %s21
    %s36 = sphi 0, %s22
    %s40 = sphi 0, %s40
    %s42 = sphi 0, %s40
    %s43 = sphi 0, %s42
    %s57 = sphi 0, %s43
    %s61 = sphi 0, %s61
    %s63 = sphi 0, %s61
    %s64 = sphi 0, %s63
    %s78 = sphi 0, %s64
    %s84 = sphi 0, %s86
    %s87 = sphi 0, %s84
    %s88 = sphi 0, %s87
    %s104 = sphi 0, %s88
    %s110 = sphi 0, %s112
    %s113 = sphi 0, %s110
    %s114 = sphi 0, %s113
    %s130 = sphi 0, %s114
    %s136 = sphi 0, %s138
    %s139 = sphi 0, %s136
    %s140 = sphi 0, %s139
    %s156 = sphi 0, %s140
  $region4: #{egcl_forward.1} parent=0 // loop_header_branch
    %14 = sbr.rel (%p12) target = $region8
  $region5: #{egcl_forward.1} parent=0 // loop_body
    %s16 = ssub.s32 %s11, 1
    %s17 = ssub.s32 %s11, 2
    %s18 = sadd.s32 %s11, 1
    %s20 = sadd.s32 %s19, 1
    %p23 = scmp.eq.s32.totalorder %s11, 1
    %p24 = scmp.ne.s32.totalorder %s19, %s21
    %p25 = scmp.eq.s32.totalorder %s11, 0
    %p26 = por %p24, %p25
    %p27 = scmp.ne.s32.totalorder %s19, %s21
    %p28 = scmp.eq.s32.totalorder %s16, 1
    %p29 = por %p27, %p28
    %p30 = scmp.ne.s32.totalorder %s21, %s22
    %p31 = scmp.eq.s32.totalorder %s16, 0
    %p32 = por %p30, %p31
    %p33 = scmp.ne.s32.totalorder %s21, %s22
    %p34 = scmp.eq.s32.totalorder %s17, 1
    %p35 = por %p33, %p34
    %p37 = scmp.ne.s32.totalorder %s22, %s36
    %p38 = scmp.eq.s32.totalorder %s17, 0
    %p39 = por %p37, %p38
    %s41 = sadd.s32 %s40, 1
    %p44 = scmp.eq.s32.totalorder %s11, 1
    %p45 = scmp.ne.s32.totalorder %s40, %s42
    %p46 = scmp.eq.s32.totalorder %s11, 0
    %p47 = por %p45, %p46
    %p48 = scmp.ne.s32.totalorder %s40, %s42
    %p49 = scmp.eq.s32.totalorder %s16, 1
    %p50 = por %p48, %p49
    %p51 = scmp.ne.s32.totalorder %s42, %s43
    %p52 = scmp.eq.s32.totalorder %s16, 0
    %p53 = por %p51, %p52
    %p54 = scmp.ne.s32.totalorder %s42, %s43
    %p55 = scmp.eq.s32.totalorder %s17, 1
    %p56 = por %p54, %p55
    %p58 = scmp.ne.s32.totalorder %s43, %s57
    %p59 = scmp.eq.s32.totalorder %s17, 0
    %p60 = por %p58, %p59
    %s62 = sadd.s32 %s61, 1
    %p65 = scmp.eq.s32.totalorder %s11, 1
    %p66 = scmp.ne.s32.totalorder %s61, %s63
    %p67 = scmp.eq.s32.totalorder %s11, 0
    %p68 = por %p66, %p67
    %p69 = scmp.ne.s32.totalorder %s61, %s63
    %p70 = scmp.eq.s32.totalorder %s16, 1
    %p71 = por %p69, %p70
    %p72 = scmp.ne.s32.totalorder %s63, %s64
    %p73 = scmp.eq.s32.totalorder %s16, 0
    %p74 = por %p72, %p73
    %p75 = scmp.ne.s32.totalorder %s63, %s64
    %p76 = scmp.eq.s32.totalorder %s17, 1
    %p77 = por %p75, %p76
    %p79 = scmp.ne.s32.totalorder %s64, %s78
    %p80 = scmp.eq.s32.totalorder %s17, 0
    %p81 = por %p79, %p80
    %s82 = ssub.s32 %s11, %s18
    %p83 = scmp.eq.s32.totalorder %s82, 0
    %s85 = sadd.s32 %s84, 1
    %s86 = scalar_select %p83, %s84, %s85
    %p89 = pneg %p83
    %p90 = scmp.eq.s32.totalorder %s11, 1
    %p91 = por %p89, %p90
    %p92 = scmp.ne.s32.totalorder %s84, %s87
    %p93 = scmp.eq.s32.totalorder %s11, 0
    %p94 = por %p92, %p93
    %p95 = scmp.ne.s32.totalorder %s84, %s87
    %p96 = scmp.eq.s32.totalorder %s16, 1
    %p97 = por %p95, %p96
    %p98 = scmp.ne.s32.totalorder %s87, %s88
    %p99 = scmp.eq.s32.totalorder %s16, 0
    %p100 = por %p98, %p99
    %p101 = scmp.ne.s32.totalorder %s87, %s88
    %p102 = scmp.eq.s32.totalorder %s17, 1
    %p103 = por %p101, %p102
    %p105 = scmp.ne.s32.totalorder %s88, %s104
    %p106 = scmp.eq.s32.totalorder %s17, 0
    %p107 = por %p105, %p106
    %s108 = ssub.s32 %s11, %s18
    %p109 = scmp.eq.s32.totalorder %s108, 0
    %s111 = sadd.s32 %s110, 1
    %s112 = scalar_select %p109, %s110, %s111
    %p115 = pneg %p109
    %p116 = scmp.eq.s32.totalorder %s11, 1
    %p117 = por %p115, %p116
    %p118 = scmp.ne.s32.totalorder %s110, %s113
    %p119 = scmp.eq.s32.totalorder %s11, 0
    %p120 = por %p118, %p119
    %p121 = scmp.ne.s32.totalorder %s110, %s113
    %p122 = scmp.eq.s32.totalorder %s16, 1
    %p123 = por %p121, %p122
    %p124 = scmp.ne.s32.totalorder %s113, %s114
    %p125 = scmp.eq.s32.totalorder %s16, 0
    %p126 = por %p124, %p125
    %p127 = scmp.ne.s32.totalorder %s113, %s114
    %p128 = scmp.eq.s32.totalorder %s17, 1
    %p129 = por %p127, %p128
    %p131 = scmp.ne.s32.totalorder %s114, %s130
    %p132 = scmp.eq.s32.totalorder %s17, 0
    %p133 = por %p131, %p132
    %s134 = ssub.s32 %s11, %s18
    %p135 = scmp.eq.s32.totalorder %s134, 0
    %s137 = sadd.s32 %s136, 1
    %s138 = scalar_select %p135, %s136, %s137
    %p141 = pneg %p135
    %p142 = scmp.eq.s32.totalorder %s11, 1
    %p143 = por %p141, %p142
    %p144 = scmp.ne.s32.totalorder %s136, %s139
    %p145 = scmp.eq.s32.totalorder %s11, 0
    %p146 = por %p144, %p145
    %p147 = scmp.ne.s32.totalorder %s136, %s139
    %p148 = scmp.eq.s32.totalorder %s16, 1
    %p149 = por %p147, %p148
    %p150 = scmp.ne.s32.totalorder %s139, %s140
    %p151 = scmp.eq.s32.totalorder %s16, 0
    %p152 = por %p150, %p151
    %p153 = scmp.ne.s32.totalorder %s139, %s140
    %p154 = scmp.eq.s32.totalorder %s17, 1
    %p155 = por %p153, %p154
    %p157 = scmp.ne.s32.totalorder %s140, %s156
    %p158 = scmp.eq.s32.totalorder %s17, 0
    %p159 = por %p157, %p158
    %p160 = scmp.le.s32.totalorder 1, %s11
    %p161 = scmp.lt.s32.totalorder %s11, 3
    %p162 = pnand %p160, %p161
    %p163 = pneg %p162
    // Predicated region
    $region9: #{egcl_forward.1} parent=5 // pred_check
      _
    $region10: #{egcl_forward.1} parent=5 // pred_check_branch
      %165 = sbr.rel (%p162) target = $region12
    $region11: #{egcl_forward.1} parent=5 // pred_region
      %s166 = ssub.s32 %s11, 1
      // Predicated region
      $region13: #{egcl_forward.1} parent=11 // pred_check
        %p167 = pneg %p32
      $region14: #{egcl_forward.1} parent=11 // pred_check_branch
        %169 = sbr.rel (%p167) target = $region16
      $region15: #{egcl_forward.1} parent=11 // pred_region
        _
      $region16: #{egcl_forward.1} parent=11 // pred_fallthru
        _
      // Predicated region
      $region17: #{egcl_forward.1} parent=11 // pred_check
        %p170 = pneg %p53
      $region18: #{egcl_forward.1} parent=11 // pred_check_branch
        %172 = sbr.rel (%p170) target = $region20
      $region19: #{egcl_forward.1} parent=11 // pred_region
        _
      $region20: #{egcl_forward.1} parent=11 // pred_fallthru
        _
      // Predicated region
      $region21: #{egcl_forward.1} parent=11 // pred_check
        %p173 = pneg %p74
      $region22: #{egcl_forward.1} parent=11 // pred_check_branch
        %175 = sbr.rel (%p173) target = $region24
      $region23: #{egcl_forward.1} parent=11 // pred_region
        _
      $region24: #{egcl_forward.1} parent=11 // pred_fallthru
        _
    $region12: #{egcl_forward.1} parent=5 // pred_fallthru
      _
    %p176 = scmp.lt.s32.totalorder %s11, 2
    // Predicated region
    $region25: #{egcl_forward.1} parent=5 // pred_check
      %p177 = pneg %p176
    $region26: #{egcl_forward.1} parent=5 // pred_check_branch
      %179 = sbr.rel (%p177) target = $region28
    $region27: #{egcl_forward.1} parent=5 // pred_region
      // Predicated region
      $region29: #{egcl_forward.1} parent=27 // pred_check
        %p180 = pneg %p94
      $region30: #{egcl_forward.1} parent=27 // pred_check_branch
        %182 = sbr.rel (%p180) target = $region32
      $region31: #{egcl_forward.1} parent=27 // pred_region
        %p183 = scmp.lt.s32.totalorder %s11, 1
        %s184 = scalar_select %p183, %s11, 1
        %s185 = smul.addr %s184, 4
        %s186 = smul.addr %s185, 8
        %s187 = scalar_lea.vmem %s3, %s186
      $region32: #{egcl_forward.1} parent=27 // pred_fallthru
        _
      // Predicated region
      $region33: #{egcl_forward.1} parent=27 // pred_check
        %p188 = pneg %p120
      $region34: #{egcl_forward.1} parent=27 // pred_check_branch
        %190 = sbr.rel (%p188) target = $region36
      $region35: #{egcl_forward.1} parent=27 // pred_region
        %p191 = scmp.lt.s32.totalorder %s11, 1
        %s192 = scalar_select %p191, %s11, 1
        %s193 = smul.addr %s192, 4
        %s194 = smul.addr %s193, 8
        %s195 = scalar_lea.vmem %s4, %s194
      $region36: #{egcl_forward.1} parent=27 // pred_fallthru
        _
    $region28: #{egcl_forward.1} parent=5 // pred_fallthru
      _
    %p196 = scmp.le.s32.totalorder 1, %s11
    %p197 = scmp.lt.s32.totalorder %s11, 3
    %p198 = pnand %p196, %p197
    %p199 = pneg %p198
    // Predicated region
    $region37: #{egcl_forward.1} parent=5 // pred_check
      _
    $region38: #{egcl_forward.1} parent=5 // pred_check_branch
      %201 = sbr.rel (%p198) target = $region40
    $region39: #{egcl_forward.1} parent=5 // pred_region
      %s202 = ssub.s32 %s11, 1
      %p203 = pneg %p32
      %p204 = pneg %p29
      %p205 = pneg %p53
      %p206 = pneg %p50
      %p207 = pneg %p74
      %p208 = pneg %p71
      %p209 = scmp.lt.s32.totalorder %s16, 1
      %s210 = scalar_select %p209, %s16, 1
      %s211 = smul.addr %s210, 4
      %s212 = smul.addr %s211, 8
      %s213 = scalar_lea.vmem %s3, %s212
      %p214 = pneg %p100
      %p215 = pneg %p97
      %p216 = scmp.lt.s32.totalorder %s16, 1
      %s217 = scalar_select %p216, %s16, 1
      %s218 = smul.addr %s217, 4
      %s219 = smul.addr %s218, 8
      %s220 = scalar_lea.vmem %s4, %s219
      %p221 = pneg %p126
      %p222 = pneg %p123
      %p223 = pneg %p152
      %p224 = pneg %p149
      %p225 = scmp.lt.s32.totalorder %s16, 1
      %s226 = scalar_select %p225, %s16, 1
      %s227 = smul.addr %s226, 4
      %s228 = smul.addr %s227, 8
      %s229 = scalar_lea.vmem %s5, %s228
      %p230 = scmp.lt.s32.totalorder %s16, 1
      %s231 = scalar_select %p230, %s16, 1
      %s232 = smul.addr %s231, 4
      %s233 = smul.addr %s232, 8
      %s234 = scalar_lea.vmem %s3, %s233
      %p235 = scmp.lt.s32.totalorder %s16, 1
      %s236 = scalar_select %p235, %s16, 1
      %s237 = smul.addr %s236, 4
      %s238 = smul.addr %s237, 8
      %s239 = scalar_lea.vmem %s4, %s238
      %p240 = scmp.lt.s32.totalorder %s16, 1
      %s241 = scalar_select %p240, %s16, 1
      %s242 = smul.addr %s241, 4
      %s243 = smul.addr %s242, 8
      %s244 = scalar_lea.vmem %s5, %s243
      %v245 = vld [vmem:[%s234] sm:$0xff]
      %v246 = vld [vmem:[%s234 + $0x8] sm:$0xff]
      %v247 = vld [vmem:[%s234 + $0x10] sm:$0xff]
      %v248 = vld [vmem:[%s234 + $0x18] sm:$0xff]
      %v249 = vld [vmem:[%s239] sm:$0xff]
      %v250 = vld [vmem:[%s239 + $0x8] sm:$0xff]
      %v251 = vld [vmem:[%s239 + $0x10] sm:$0xff]
      %v252 = vld [vmem:[%s239 + $0x18] sm:$0xff]
      %v253 = vld [vmem:[%s0] sm:$0xff]
      %v254 = vld [vmem:[%s0 + $0x8] sm:$0xff]
      %v255 = vld [vmem:[%s0 + $0x10] sm:$0xff]
      %v256 = vld [vmem:[%s0 + $0x18] sm:$0xff]
      %v257 = vld [vmem:[%s0 + $0x20] sm:$0xff]
      %v258 = vld [vmem:[%s0 + $0x28] sm:$0xff]
      %v259 = vld [vmem:[%s0 + $0x30] sm:$0xff]
      %v260 = vld [vmem:[%s0 + $0x38] sm:$0xff]
      %v261 = vld [vmem:[%s0 + $0x40] sm:$0xff]
      %v262 = vld [vmem:[%s0 + $0x48] sm:$0xff]
      %v263 = vld [vmem:[%s0 + $0x50] sm:$0xff]
      %v264 = vld [vmem:[%s0 + $0x58] sm:$0xff]
      %v265 = vld [vmem:[%s0 + $0x60] sm:$0xff]
      %v266 = vld [vmem:[%s0 + $0x68] sm:$0xff]
      %v267 = vld [vmem:[%s0 + $0x70] sm:$0xff]
      %v268 = vld [vmem:[%s0 + $0x78] sm:$0xff]
      %v269 = vld [vmem:[%s0 + $0x80] sm:$0xff]
      %v270 = vld [vmem:[%s0 + $0x88] sm:$0xff]
      %v271 = vld [vmem:[%s0 + $0x90] sm:$0xff]
      %v272 = vld [vmem:[%s0 + $0x98] sm:$0xff]
      %v273 = vld [vmem:[%s0 + $0xa0] sm:$0xff]
      %v274 = vld [vmem:[%s0 + $0xa8] sm:$0xff]
      %v275 = vld [vmem:[%s0 + $0xb0] sm:$0xff]
      %v276 = vld [vmem:[%s0 + $0xb8] sm:$0xff]
      %v277 = vld [vmem:[%s0 + $0xc0] sm:$0xff]
      %v278 = vld [vmem:[%s0 + $0xc8] sm:$0xff]
      %v279 = vld [vmem:[%s0 + $0xd0] sm:$0xff]
      %v280 = vld [vmem:[%s0 + $0xd8] sm:$0xff]
      %v281 = vld [vmem:[%s1] sm:$0xff]
      %v282 = vld [vmem:[%s1 + $0x8] sm:$0xff]
      %v283 = vld [vmem:[%s1 + $0x10] sm:$0xff]
      %v284 = vld [vmem:[%s1 + $0x18] sm:$0xff]
      %v285 = vld [vmem:[%s1 + $0x20] sm:$0xff]
      %v286 = vld [vmem:[%s1 + $0x28] sm:$0xff]
      %v287 = vld [vmem:[%s1 + $0x30] sm:$0xff]
      %v288 = vld [vmem:[%s1 + $0x38] sm:$0xff]
      %v289 = vld [vmem:[%s2] sm:$0xff]
      %v290 = vld [vmem:[%s2 + $0x8] sm:$0xff]
      %v291 = vld [vmem:[%s2 + $0x10] sm:$0xff]
      %v292 = vld [vmem:[%s2 + $0x18] sm:$0xff]
      %v293 = vld [vmem:[%s2 + $0x20] sm:$0xff]
      %v294 = vld [vmem:[%s2 + $0x28] sm:$0xff]
      %v295 = vld [vmem:[%s2 + $0x30] sm:$0xff]
      %v296 = vld [vmem:[%s2 + $0x38] sm:$0xff]
      %v297 = vld [vmem:[%s2 + $0x40] sm:$0xff]
      %v298 = vld [vmem:[%s2 + $0x48] sm:$0xff]
      %v299 = vld [vmem:[%s2 + $0x50] sm:$0xff]
      %v300 = vld [vmem:[%s2 + $0x58] sm:$0xff]
      %v301 = vld [vmem:[%s2 + $0x60] sm:$0xff]
      %v302 = vld [vmem:[%s2 + $0x68] sm:$0xff]
      %v303 = vld [vmem:[%s2 + $0x70] sm:$0xff]
      %v304 = vld [vmem:[%s2 + $0x78] sm:$0xff]
      %v305 = vld [vmem:[%s2 + $0x80] sm:$0xff]
      %v306 = vld [vmem:[%s2 + $0x88] sm:$0xff]
      %v307 = vld [vmem:[%s2 + $0x90] sm:$0xff]
      %v308 = vld [vmem:[%s2 + $0x98] sm:$0xff]
      %v309 = vld [vmem:[%s2 + $0xa0] sm:$0xff]
      %v310 = vld [vmem:[%s2 + $0xa8] sm:$0xff]
      %v311 = vld [vmem:[%s2 + $0xb0] sm:$0xff]
      %v312 = vld [vmem:[%s2 + $0xb8] sm:$0xff]
      %v313 = vld [vmem:[%s2 + $0xc0] sm:$0x1]
      %v314 = vld [vmem:[%s2 + $0xc8] sm:$0x1]
      %v315 = vld [vmem:[%s2 + $0xd0] sm:$0x1]
      %v316 = vld [vmem:[%s2 + $0xd8] sm:$0x1]
      %v317 = vld [vmem:[%s2 + $0xe0] sm:$0x1]
      %v318 = vld [vmem:[%s2 + $0xe8] sm:$0x1]
      %vm319 = vcmask 261120
      %v321 = vsel %vm319, %v245, 0
      %v324 = vsel %vm319, %v246, 0
      %v327 = vsel %vm319, %v247, 0
      %v330 = vsel %vm319, %v248, 0
      %332 = vmatprep.subr.mxu0 0.0
      %333 = vmatpush1.msra.mxu0 0.0
      %334 = vmatprep.subr.mxu0 0.0
      %335 = vmatpush1.msra.mxu0 0.0
      %336 = vmatprep.subr.mxu0 0.0
      %337 = vmatpush1.msra.mxu0 0.0
      %338 = vmatprep.subr.mxu0 0.0
      %339 = vmatpush1.msra.mxu0 0.0
      %340 = vmatprep.subr.mxu0 0.0
      %341 = vmatpush1.msra.mxu0 0.0
      %342 = vmatprep.subr.mxu0 0.0
      %343 = vmatpush1.msra.mxu0 0.0
      %344 = vmatprep.subr.mxu0 0.0
      %345 = vmatpush1.msra.mxu0 0.0
      %346 = vmatprep.subr.mxu0 0.0
      %347 = vmatpush1.msra.mxu0 0.0
      %348 = vmatprep.subr.mxu0 0.0
      %349 = vmatpush1.msra.mxu0 0.0
      %350 = vmatprep.subr.mxu0 0.0
      %351 = vmatpush1.msra.mxu0 0.0
      %352 = vmatprep.subr.mxu0 0.0
      %353 = vmatpush1.msra.mxu0 0.0
      %354 = vmatprep.subr.mxu0 0.0
      %355 = vmatpush1.msra.mxu0 0.0
      %356 = vmatprep.subr.mxu0 0.0
      %357 = vmatpush1.msra.mxu0 %v292
      %358 = vmatprep.subr.mxu0 0.0
      %359 = vmatpush1.msra.mxu0 %v291
      %360 = vmatprep.subr.mxu0 0.0
      %361 = vmatpush1.msra.mxu0 %v290
      %362 = vmatprep.subr.mxu0 0.0
      %363 = vmatpush1.msra.mxu0 %v289
      %364 = vmatprep.subr.mxu0 0.0
      %365 = vmatpush2.msra.mxu0 0.0
      %366 = vmatprep.subr.mxu0 0.0
      %367 = vmatpush2.msra.mxu0 0.0
      %368 = vmatprep.subr.mxu0 0.0
      %369 = vmatpush2.msra.mxu0 0.0
      %370 = vmatprep.subr.mxu0 0.0
      %371 = vmatpush2.msra.mxu0 0.0
      %372 = vmatprep.subr.mxu0 0.0
      %373 = vmatpush2.msra.mxu0 0.0
      %374 = vmatprep.subr.mxu0 0.0
      %375 = vmatpush2.msra.mxu0 0.0
      %376 = vmatprep.subr.mxu0 0.0
      %377 = vmatpush2.msra.mxu0 0.0
      %378 = vmatprep.subr.mxu0 0.0
      %379 = vmatpush2.msra.mxu0 0.0
      %380 = vmatprep.subr.mxu0 0.0
      %381 = vmatpush2.msra.mxu0 0.0
      %382 = vmatprep.subr.mxu0 0.0
      %383 = vmatpush2.msra.mxu0 0.0
      %384 = vmatprep.subr.mxu0 0.0
      %385 = vmatpush2.msra.mxu0 0.0
      %386 = vmatprep.subr.mxu0 0.0
      %387 = vmatpush2.msra.mxu0 0.0
      %388 = vmatprep.subr.mxu0 0.0
      %389 = vmatpush2.msra.mxu0 0.0
      %390 = vmatprep.subr.mxu0 0.0
      %391 = vmatpush2.msra.mxu0 0.0
      %392 = vmatprep.subr.mxu0 0.0
      %393 = vmatpush2.msra.mxu0 0.0
      %394 = vmatprep.subr.mxu0 0.0
      %395 = vmatpush2.msra.mxu0 0.0
      %396 = vmatprep.mubr.f32.mxu0 0.0
      %397 = vmatmul.mubr.f32.gmra.mxu0 %v321
      %v398 = vpop.f32.mrf.mxu0
      %v399 = vadd.f32 0.0, %v398
      %v400 = vpop.f32.mrf.mxu0
      %401 = vmatprep.mubr.f32.mxu0 0.0
      %402 = vmatmul.mubr.f32.gmra.mxu0 %v324
      %v403 = vpop.f32.mrf.mxu0
      %v404 = vadd.f32 0.0, %v403
      %v405 = vpop.f32.mrf.mxu0
      %406 = vmatprep.mubr.f32.mxu0 0.0
      %407 = vmatmul.mubr.f32.gmra.mxu0 %v327
      %v408 = vpop.f32.mrf.mxu0
      %v409 = vadd.f32 0.0, %v408
      %v410 = vpop.f32.mrf.mxu0
      %411 = vmatprep.mubr.f32.mxu0 0.0
      %412 = vmatmul.mubr.f32.gmra.mxu0 %v330
      %v413 = vpop.f32.mrf.mxu0
      %v414 = vadd.f32 0.0, %v413
      %v415 = vpop.f32.mrf.mxu0
      %416 = vdwg.mxu0
      %421 = vrot.lane.b32.xlu0 %v249, 32
      %v422 = vpop.permute.xlu0 %421
      %423 = vrot.lane.b32.xlu0 %v250, 32
      %v424 = vpop.permute.xlu0 %423
      %425 = vrot.lane.b32.xlu0 %v251, 32
      %v426 = vpop.permute.xlu0 %425
      %427 = vrot.lane.b32.xlu0 %v252, 32
      %v428 = vpop.permute.xlu0 %427
      %v433 = vsel %vm319, %v399, %v422
      %v434 = vsel %vm319, %v404, %v424
      %v435 = vsel %vm319, %v409, %v426
      %v436 = vsel %vm319, %v414, %v428
      %v437 = vsub.f32 0.0, %v249
      %v438 = vsub.f32 0.0, %v250
      %v439 = vsub.f32 0.0, %v251
      %v440 = vsub.f32 0.0, %v252
      %445 = vrot.lane.b32.xlu0 %v399, 96
      %v446 = vpop.permute.xlu0 %445
      %447 = vrot.lane.b32.xlu0 %v404, 96
      %v448 = vpop.permute.xlu0 %447
      %449 = vrot.lane.b32.xlu0 %v409, 96
      %v450 = vpop.permute.xlu0 %449
      %451 = vrot.lane.b32.xlu0 %v414, 96
      %v452 = vpop.permute.xlu0 %451
      %461 = vrot.lane.b32.xlu0 %v437, 32
      %v462 = vpop.permute.xlu0 %461
      %463 = vrot.lane.b32.xlu0 %v438, 32
      %v464 = vpop.permute.xlu0 %463
      %465 = vrot.lane.b32.xlu0 %v439, 32
      %v466 = vpop.permute.xlu0 %465
      %467 = vrot.lane.b32.xlu0 %v440, 32
      %v468 = vpop.permute.xlu0 %467
      %v473 = vsel %vm319, %v446, %v462
      %v474 = vsel %vm319, %v448, %v464
      %v475 = vsel %vm319, %v450, %v466
      %v476 = vsel %vm319, %v452, %v468
      %vm477 = vcmask 523264
      %v479 = vsel %vm477, %v253, 0
      %v482 = vsel %vm477, %v254, 0
      %v485 = vsel %vm477, %v255, 0
      %v488 = vsel %vm477, %v256, 0
      %v491 = vsel %vm477, %v257, 0
      %v494 = vsel %vm477, %v258, 0
      %v497 = vsel %vm477, %v259, 0
      %v500 = vsel %vm477, %v260, 0
      %v503 = vsel %vm477, %v261, 0
      %v506 = vsel %vm477, %v262, 0
      %v509 = vsel %vm477, %v263, 0
      %v512 = vsel %vm477, %v264, 0
      %v515 = vsel %vm477, %v265, 0
      %v518 = vsel %vm477, %v266, 0
      %v521 = vsel %vm477, %v267, 0
      %v524 = vsel %vm477, %v268, 0
      %v527 = vsel %vm477, %v269, 0
      %v530 = vsel %vm477, %v270, 0
      %v533 = vsel %vm477, %v271, 0
      %v536 = vsel %vm477, %v272, 0
      %v539 = vsel %vm477, %v273, 0
      %v542 = vsel %vm477, %v274, 0
      %v545 = vsel %vm477, %v275, 0
      %v548 = vsel %vm477, %v276, 0
      %v551 = vsel %vm477, %v277, 0
      %v554 = vsel %vm477, %v278, 0
      %v557 = vsel %vm477, %v279, 0
      %v560 = vsel %vm477, %v280, 0
      %562 = vmatprep.subr.mxu0 0.0
      %563 = vmatpush1.msra.mxu0 0.0
      %564 = vmatprep.subr.mxu0 0.0
      %565 = vmatpush1.msra.mxu0 0.0
      %566 = vmatprep.subr.mxu0 0.0
      %567 = vmatpush1.msra.mxu0 0.0
      %568 = vmatprep.subr.mxu0 0.0
      %569 = vmatpush1.msra.mxu0 0.0
      %570 = vmatprep.subr.mxu0 0.0
      %571 = vmatpush1.msra.mxu0 0.0
      %572 = vmatprep.subr.mxu0 0.0
      %573 = vmatpush1.msra.mxu0 0.0
      %574 = vmatprep.subr.mxu0 0.0
      %575 = vmatpush1.msra.mxu0 0.0
      %576 = vmatprep.subr.mxu0 0.0
      %577 = vmatpush1.msra.mxu0 0.0
      %578 = vmatprep.subr.mxu0 0.0
      %579 = vmatpush1.msra.mxu0 %v476
      %580 = vmatprep.subr.mxu0 0.0
      %581 = vmatpush1.msra.mxu0 %v475
      %582 = vmatprep.subr.mxu0 0.0
      %583 = vmatpush1.msra.mxu0 %v474
      %584 = vmatprep.subr.mxu0 0.0
      %585 = vmatpush1.msra.mxu0 %v473
      %586 = vmatprep.subr.mxu0 0.0
      %587 = vmatpush1.msra.mxu0 %v436
      %588 = vmatprep.subr.mxu0 0.0
      %589 = vmatpush1.msra.mxu0 %v435
      %590 = vmatprep.subr.mxu0 0.0
      %591 = vmatpush1.msra.mxu0 %v434
      %592 = vmatprep.subr.mxu0 0.0
      %593 = vmatpush1.msra.mxu0 %v433
      %594 = vmatprep.subr.mxu0 0.0
      %595 = vmatpush2.msra.mxu0 0.0
      %596 = vmatprep.subr.mxu0 0.0
      %597 = vmatpush2.msra.mxu0 0.0
      %598 = vmatprep.subr.mxu0 0.0
      %599 = vmatpush2.msra.mxu0 0.0
      %600 = vmatprep.subr.mxu0 0.0
      %601 = vmatpush2.msra.mxu0 0.0
      %602 = vmatprep.subr.mxu0 0.0
      %603 = vmatpush2.msra.mxu0 0.0
      %604 = vmatprep.subr.mxu0 0.0
      %605 = vmatpush2.msra.mxu0 0.0
      %606 = vmatprep.subr.mxu0 0.0
      %607 = vmatpush2.msra.mxu0 0.0
      %608 = vmatprep.subr.mxu0 0.0
      %609 = vmatpush2.msra.mxu0 0.0
      %610 = vmatprep.subr.mxu0 0.0
      %611 = vmatpush2.msra.mxu0 0.0
      %612 = vmatprep.subr.mxu0 0.0
      %613 = vmatpush2.msra.mxu0 0.0
      %614 = vmatprep.subr.mxu0 0.0
      %615 = vmatpush2.msra.mxu0 0.0
      %616 = vmatprep.subr.mxu0 0.0
      %617 = vmatpush2.msra.mxu0 0.0
      %618 = vmatprep.subr.mxu0 0.0
      %619 = vmatpush2.msra.mxu0 0.0
      %620 = vmatprep.subr.mxu0 0.0
      %621 = vmatpush2.msra.mxu0 0.0
      %622 = vmatprep.subr.mxu0 0.0
      %623 = vmatpush2.msra.mxu0 0.0
      %624 = vmatprep.subr.mxu0 0.0
      %625 = vmatpush2.msra.mxu0 0.0
      %626 = vmatprep.mubr.f32.mxu0 0.0
      %627 = vmatmul.mubr.f32.gmra.mxu0 %v479
      %v628 = vpop.f32.mrf.mxu0
      %v629 = vadd.f32 0.0, %v628
      %v630 = vpop.f32.mrf.mxu0
      %631 = vmatprep.mubr.f32.mxu0 0.0
      %632 = vmatmul.mubr.f32.gmra.mxu0 %v482
      %v633 = vpop.f32.mrf.mxu0
      %v634 = vadd.f32 0.0, %v633
      %v635 = vpop.f32.mrf.mxu0
      %636 = vmatprep.mubr.f32.mxu0 0.0
      %637 = vmatmul.mubr.f32.gmra.mxu0 %v485
      %v638 = vpop.f32.mrf.mxu0
      %v639 = vadd.f32 0.0, %v638
      %v640 = vpop.f32.mrf.mxu0
      %641 = vmatprep.mubr.f32.mxu0 0.0
      %642 = vmatmul.mubr.f32.gmra.mxu0 %v488
      %v643 = vpop.f32.mrf.mxu0
      %v644 = vadd.f32 0.0, %v643
      %v645 = vpop.f32.mrf.mxu0
      %646 = vmatprep.mubr.f32.mxu0 0.0
      %647 = vmatmul.mubr.f32.gmra.mxu0 %v491
      %v648 = vpop.f32.mrf.mxu0
      %v649 = vadd.f32 0.0, %v648
      %v650 = vpop.f32.mrf.mxu0
      %651 = vmatprep.mubr.f32.mxu0 0.0
      %652 = vmatmul.mubr.f32.gmra.mxu0 %v494
      %v653 = vpop.f32.mrf.mxu0
      %v654 = vadd.f32 0.0, %v653
      %v655 = vpop.f32.mrf.mxu0
      %656 = vmatprep.mubr.f32.mxu0 0.0
      %657 = vmatmul.mubr.f32.gmra.mxu0 %v497
      %v658 = vpop.f32.mrf.mxu0
      %v659 = vadd.f32 0.0, %v658
      %v660 = vpop.f32.mrf.mxu0
      %661 = vmatprep.mubr.f32.mxu0 0.0
      %662 = vmatmul.mubr.f32.gmra.mxu0 %v500
      %v663 = vpop.f32.mrf.mxu0
      %v664 = vadd.f32 0.0, %v663
      %v665 = vpop.f32.mrf.mxu0
      %666 = vmatprep.mubr.f32.mxu0 0.0
      %667 = vmatmul.mubr.f32.gmra.mxu0 %v503
      %v668 = vpop.f32.mrf.mxu0
      %v669 = vadd.f32 0.0, %v668
      %v670 = vpop.f32.mrf.mxu0
      %671 = vmatprep.mubr.f32.mxu0 0.0
      %672 = vmatmul.mubr.f32.gmra.mxu0 %v506
      %v673 = vpop.f32.mrf.mxu0
      %v674 = vadd.f32 0.0, %v673
      %v675 = vpop.f32.mrf.mxu0
      %676 = vmatprep.mubr.f32.mxu0 0.0
      %677 = vmatmul.mubr.f32.gmra.mxu0 %v509
      %v678 = vpop.f32.mrf.mxu0
      %v679 = vadd.f32 0.0, %v678
      %v680 = vpop.f32.mrf.mxu0
      %681 = vmatprep.mubr.f32.mxu0 0.0
      %682 = vmatmul.mubr.f32.gmra.mxu0 %v512
      %v683 = vpop.f32.mrf.mxu0
      %v684 = vadd.f32 0.0, %v683
      %v685 = vpop.f32.mrf.mxu0
      %686 = vmatprep.mubr.f32.mxu0 0.0
      %687 = vmatmul.mubr.f32.gmra.mxu0 %v515
      %v688 = vpop.f32.mrf.mxu0
      %v689 = vadd.f32 0.0, %v688
      %v690 = vpop.f32.mrf.mxu0
      %691 = vmatprep.mubr.f32.mxu0 0.0
      %692 = vmatmul.mubr.f32.gmra.mxu0 %v518
      %v693 = vpop.f32.mrf.mxu0
      %v694 = vadd.f32 0.0, %v693
      %v695 = vpop.f32.mrf.mxu0
      %696 = vmatprep.mubr.f32.mxu0 0.0
      %697 = vmatmul.mubr.f32.gmra.mxu0 %v521
      %v698 = vpop.f32.mrf.mxu0
      %v699 = vadd.f32 0.0, %v698
      %v700 = vpop.f32.mrf.mxu0
      %701 = vmatprep.mubr.f32.mxu0 0.0
      %702 = vmatmul.mubr.f32.gmra.mxu0 %v524
      %v703 = vpop.f32.mrf.mxu0
      %v704 = vadd.f32 0.0, %v703
      %v705 = vpop.f32.mrf.mxu0
      %706 = vmatprep.mubr.f32.mxu0 0.0
      %707 = vmatmul.mubr.f32.gmra.mxu0 %v527
      %v708 = vpop.f32.mrf.mxu0
      %v709 = vadd.f32 0.0, %v708
      %v710 = vpop.f32.mrf.mxu0
      %711 = vmatprep.mubr.f32.mxu0 0.0
      %712 = vmatmul.mubr.f32.gmra.mxu0 %v530
      %v713 = vpop.f32.mrf.mxu0
      %v714 = vadd.f32 0.0, %v713
      %v715 = vpop.f32.mrf.mxu0
      %716 = vmatprep.mubr.f32.mxu0 0.0
      %717 = vmatmul.mubr.f32.gmra.mxu0 %v533
      %v718 = vpop.f32.mrf.mxu0
      %v719 = vadd.f32 0.0, %v718
      %v720 = vpop.f32.mrf.mxu0
      %721 = vmatprep.mubr.f32.mxu0 0.0
      %722 = vmatmul.mubr.f32.gmra.mxu0 %v536
      %v723 = vpop.f32.mrf.mxu0
      %v724 = vadd.f32 0.0, %v723
      %v725 = vpop.f32.mrf.mxu0
      %726 = vmatprep.mubr.f32.mxu0 0.0
      %727 = vmatmul.mubr.f32.gmra.mxu0 %v539
      %v728 = vpop.f32.mrf.mxu0
      %v729 = vadd.f32 0.0, %v728
      %v730 = vpop.f32.mrf.mxu0
      %731 = vmatprep.mubr.f32.mxu0 0.0
      %732 = vmatmul.mubr.f32.gmra.mxu0 %v542
      %v733 = vpop.f32.mrf.mxu0
      %v734 = vadd.f32 0.0, %v733
      %v735 = vpop.f32.mrf.mxu0
      %736 = vmatprep.mubr.f32.mxu0 0.0
      %737 = vmatmul.mubr.f32.gmra.mxu0 %v545
      %v738 = vpop.f32.mrf.mxu0
      %v739 = vadd.f32 0.0, %v738
      %v740 = vpop.f32.mrf.mxu0
      %741 = vmatprep.mubr.f32.mxu0 0.0
      %742 = vmatmul.mubr.f32.gmra.mxu0 %v548
      %v743 = vpop.f32.mrf.mxu0
      %v744 = vadd.f32 0.0, %v743
      %v745 = vpop.f32.mrf.mxu0
      %746 = vmatprep.mubr.f32.mxu0 0.0
      %747 = vmatmul.mubr.f32.gmra.mxu0 %v551
      %v748 = vpop.f32.mrf.mxu0
      %v749 = vadd.f32 0.0, %v748
      %v750 = vpop.f32.mrf.mxu0
      %751 = vmatprep.mubr.f32.mxu0 0.0
      %752 = vmatmul.mubr.f32.gmra.mxu0 %v554
      %v753 = vpop.f32.mrf.mxu0
      %v754 = vadd.f32 0.0, %v753
      %v755 = vpop.f32.mrf.mxu0
      %756 = vmatprep.mubr.f32.mxu0 0.0
      %757 = vmatmul.mubr.f32.gmra.mxu0 %v557
      %v758 = vpop.f32.mrf.mxu0
      %v759 = vadd.f32 0.0, %v758
      %v760 = vpop.f32.mrf.mxu0
      %761 = vmatprep.mubr.f32.mxu0 0.0
      %762 = vmatmul.mubr.f32.gmra.mxu0 %v560
      %v763 = vpop.f32.mrf.mxu0
      %v764 = vadd.f32 0.0, %v763
      %v765 = vpop.f32.mrf.mxu0
      %766 = vdwg.mxu0
      %v767 = vmul.f32 %v629, %v629
      %v768 = vmul.f32 %v634, %v634
      %v769 = vmul.f32 %v639, %v639
      %v770 = vmul.f32 %v644, %v644
      %v771 = vmul.f32 %v649, %v649
      %v772 = vmul.f32 %v654, %v654
      %v773 = vmul.f32 %v659, %v659
      %v774 = vmul.f32 %v664, %v664
      %v775 = vmul.f32 %v669, %v669
      %v776 = vmul.f32 %v674, %v674
      %v777 = vmul.f32 %v679, %v679
      %v778 = vmul.f32 %v684, %v684
      %v779 = vmul.f32 %v689, %v689
      %v780 = vmul.f32 %v694, %v694
      %v781 = vmul.f32 %v699, %v699
      %v782 = vmul.f32 %v704, %v704
      %v783 = vmul.f32 %v709, %v709
      %v784 = vmul.f32 %v714, %v714
      %v785 = vmul.f32 %v719, %v719
      %v786 = vmul.f32 %v724, %v724
      %v787 = vmul.f32 %v729, %v729
      %v788 = vmul.f32 %v734, %v734
      %v789 = vmul.f32 %v739, %v739
      %v790 = vmul.f32 %v744, %v744
      %v791 = vmul.f32 %v749, %v749
      %v792 = vmul.f32 %v754, %v754
      %v793 = vmul.f32 %v759, %v759
      %v794 = vmul.f32 %v764, %v764
      %823 = vrot.lane.b32.xlu0 %v767, 96
      %v824 = vpop.permute.xlu0 %823
      %825 = vrot.lane.b32.xlu0 %v768, 96
      %v826 = vpop.permute.xlu0 %825
      %827 = vrot.lane.b32.xlu0 %v769, 96
      %v828 = vpop.permute.xlu0 %827
      %829 = vrot.lane.b32.xlu0 %v770, 96
      %v830 = vpop.permute.xlu0 %829
      %831 = vrot.lane.b32.xlu0 %v771, 96
      %v832 = vpop.permute.xlu0 %831
      %833 = vrot.lane.b32.xlu0 %v772, 96
      %v834 = vpop.permute.xlu0 %833
      %835 = vrot.lane.b32.xlu0 %v773, 96
      %v836 = vpop.permute.xlu0 %835
      %837 = vrot.lane.b32.xlu0 %v774, 96
      %v838 = vpop.permute.xlu0 %837
      %839 = vrot.lane.b32.xlu0 %v775, 96
      %v840 = vpop.permute.xlu0 %839
      %841 = vrot.lane.b32.xlu0 %v776, 96
      %v842 = vpop.permute.xlu0 %841
      %843 = vrot.lane.b32.xlu0 %v777, 96
      %v844 = vpop.permute.xlu0 %843
      %845 = vrot.lane.b32.xlu0 %v778, 96
      %v846 = vpop.permute.xlu0 %845
      %847 = vrot.lane.b32.xlu0 %v779, 96
      %v848 = vpop.permute.xlu0 %847
      %849 = vrot.lane.b32.xlu0 %v780, 96
      %v850 = vpop.permute.xlu0 %849
      %851 = vrot.lane.b32.xlu0 %v781, 96
      %v852 = vpop.permute.xlu0 %851
      %853 = vrot.lane.b32.xlu0 %v782, 96
      %v854 = vpop.permute.xlu0 %853
      %855 = vrot.lane.b32.xlu0 %v783, 96
      %v856 = vpop.permute.xlu0 %855
      %857 = vrot.lane.b32.xlu0 %v784, 96
      %v858 = vpop.permute.xlu0 %857
      %859 = vrot.lane.b32.xlu0 %v785, 96
      %v860 = vpop.permute.xlu0 %859
      %861 = vrot.lane.b32.xlu0 %v786, 96
      %v862 = vpop.permute.xlu0 %861
      %863 = vrot.lane.b32.xlu0 %v787, 96
      %v864 = vpop.permute.xlu0 %863
      %865 = vrot.lane.b32.xlu0 %v788, 96
      %v866 = vpop.permute.xlu0 %865
      %867 = vrot.lane.b32.xlu0 %v789, 96
      %v868 = vpop.permute.xlu0 %867
      %869 = vrot.lane.b32.xlu0 %v790, 96
      %v870 = vpop.permute.xlu0 %869
      %871 = vrot.lane.b32.xlu0 %v791, 96
      %v872 = vpop.permute.xlu0 %871
      %873 = vrot.lane.b32.xlu0 %v792, 96
      %v874 = vpop.permute.xlu0 %873
      %875 = vrot.lane.b32.xlu0 %v793, 96
      %v876 = vpop.permute.xlu0 %875
      %877 = vrot.lane.b32.xlu0 %v794, 96
      %v878 = vpop.permute.xlu0 %877
      %vm907 = vcmask 23552
      %v908 = vsel %vm907, %v824, 0.0
      %909 = vadd.xlane.f32.xlu0 %v908
      %v910 = vpop.xlane.xlu0 %909
      %v911 = vsel %vm907, %v826, 0.0
      %912 = vadd.xlane.f32.xlu0 %v911
      %v913 = vpop.xlane.xlu0 %912
      %v914 = vsel %vm907, %v828, 0.0
      %915 = vadd.xlane.f32.xlu0 %v914
      %v916 = vpop.xlane.xlu0 %915
      %v917 = vsel %vm907, %v830, 0.0
      %918 = vadd.xlane.f32.xlu0 %v917
      %v919 = vpop.xlane.xlu0 %918
      %v920 = vsel %vm907, %v832, 0.0
      %921 = vadd.xlane.f32.xlu0 %v920
      %v922 = vpop.xlane.xlu0 %921
      %v923 = vsel %vm907, %v834, 0.0
      %924 = vadd.xlane.f32.xlu0 %v923
      %v925 = vpop.xlane.xlu0 %924
      %v926 = vsel %vm907, %v836, 0.0
      %927 = vadd.xlane.f32.xlu0 %v926
      %v928 = vpop.xlane.xlu0 %927
      %v929 = vsel %vm907, %v838, 0.0
      %930 = vadd.xlane.f32.xlu0 %v929
      %v931 = vpop.xlane.xlu0 %930
      %v932 = vsel %vm907, %v840, 0.0
      %933 = vadd.xlane.f32.xlu0 %v932
      %v934 = vpop.xlane.xlu0 %933
      %v935 = vsel %vm907, %v842, 0.0
      %936 = vadd.xlane.f32.xlu0 %v935
      %v937 = vpop.xlane.xlu0 %936
      %v938 = vsel %vm907, %v844, 0.0
      %939 = vadd.xlane.f32.xlu0 %v938
      %v940 = vpop.xlane.xlu0 %939
      %v941 = vsel %vm907, %v846, 0.0
      %942 = vadd.xlane.f32.xlu0 %v941
      %v943 = vpop.xlane.xlu0 %942
      %v944 = vsel %vm907, %v848, 0.0
      %945 = vadd.xlane.f32.xlu0 %v944
      %v946 = vpop.xlane.xlu0 %945
      %v947 = vsel %vm907, %v850, 0.0
      %948 = vadd.xlane.f32.xlu0 %v947
      %v949 = vpop.xlane.xlu0 %948
      %v950 = vsel %vm907, %v852, 0.0
      %951 = vadd.xlane.f32.xlu0 %v950
      %v952 = vpop.xlane.xlu0 %951
      %v953 = vsel %vm907, %v854, 0.0
      %954 = vadd.xlane.f32.xlu0 %v953
      %v955 = vpop.xlane.xlu0 %954
      %v956 = vsel %vm907, %v856, 0.0
      %957 = vadd.xlane.f32.xlu0 %v956
      %v958 = vpop.xlane.xlu0 %957
      %v959 = vsel %vm907, %v858, 0.0
      %960 = vadd.xlane.f32.xlu0 %v959
      %v961 = vpop.xlane.xlu0 %960
      %v962 = vsel %vm907, %v860, 0.0
      %963 = vadd.xlane.f32.xlu0 %v962
      %v964 = vpop.xlane.xlu0 %963
      %v965 = vsel %vm907, %v862, 0.0
      %966 = vadd.xlane.f32.xlu0 %v965
      %v967 = vpop.xlane.xlu0 %966
      %v968 = vsel %vm907, %v864, 0.0
      %969 = vadd.xlane.f32.xlu0 %v968
      %v970 = vpop.xlane.xlu0 %969
      %v971 = vsel %vm907, %v866, 0.0
      %972 = vadd.xlane.f32.xlu0 %v971
      %v973 = vpop.xlane.xlu0 %972
      %v974 = vsel %vm907, %v868, 0.0
      %975 = vadd.xlane.f32.xlu0 %v974
      %v976 = vpop.xlane.xlu0 %975
      %v977 = vsel %vm907, %v870, 0.0
      %978 = vadd.xlane.f32.xlu0 %v977
      %v979 = vpop.xlane.xlu0 %978
      %v980 = vsel %vm907, %v872, 0.0
      %981 = vadd.xlane.f32.xlu0 %v980
      %v982 = vpop.xlane.xlu0 %981
      %v983 = vsel %vm907, %v874, 0.0
      %984 = vadd.xlane.f32.xlu0 %v983
      %v985 = vpop.xlane.xlu0 %984
      %v986 = vsel %vm907, %v876, 0.0
      %987 = vadd.xlane.f32.xlu0 %v986
      %v988 = vpop.xlane.xlu0 %987
      %v989 = vsel %vm907, %v878, 0.0
      %990 = vadd.xlane.f32.xlu0 %v989
      %v991 = vpop.xlane.xlu0 %990
      %v992 = vlaneseq
      %v993 = vshrl.u32 %v992, 7
      %v994 = vsub.s32 0, %v993
      %v995 = vrot.slane %v313, %v994
      %v996 = vmul.f32 %v910, %v995
      %v997 = vmul.f32 %v913, %v995
      %v998 = vmul.f32 %v916, %v995
      %v999 = vmul.f32 %v919, %v995
      %v1000 = vmul.f32 %v922, %v995
      %v1001 = vmul.f32 %v925, %v995
      %v1002 = vmul.f32 %v928, %v995
      %v1003 = vmul.f32 %v931, %v995
      %v1004 = vmul.f32 %v934, %v995
      %v1005 = vmul.f32 %v937, %v995
      %v1006 = vmul.f32 %v940, %v995
      %v1007 = vmul.f32 %v943, %v995
      %v1008 = vmul.f32 %v946, %v995
      %v1009 = vmul.f32 %v949, %v995
      %v1010 = vmul.f32 %v952, %v995
      %v1011 = vmul.f32 %v955, %v995
      %v1012 = vmul.f32 %v958, %v995
      %v1013 = vmul.f32 %v961, %v995
      %v1014 = vmul.f32 %v964, %v995
      %v1015 = vmul.f32 %v967, %v995
      %v1016 = vmul.f32 %v970, %v995
      %v1017 = vmul.f32 %v973, %v995
      %v1018 = vmul.f32 %v976, %v995
      %v1019 = vmul.f32 %v979, %v995
      %v1020 = vmul.f32 %v982, %v995
      %v1021 = vmul.f32 %v985, %v995
      %v1022 = vmul.f32 %v988, %v995
      %v1023 = vmul.f32 %v991, %v995
      %v1024 = vadd.f32 %v629, %v996
      %v1025 = vadd.f32 %v634, %v997
      %v1026 = vadd.f32 %v639, %v998
      %v1027 = vadd.f32 %v644, %v999
      %v1028 = vadd.f32 %v649, %v1000
      %v1029 = vadd.f32 %v654, %v1001
      %v1030 = vadd.f32 %v659, %v1002
      %v1031 = vadd.f32 %v664, %v1003
      %v1032 = vadd.f32 %v669, %v1004
      %v1033 = vadd.f32 %v674, %v1005
      %v1034 = vadd.f32 %v679, %v1006
      %v1035 = vadd.f32 %v684, %v1007
      %v1036 = vadd.f32 %v689, %v1008
      %v1037 = vadd.f32 %v694, %v1009
      %v1038 = vadd.f32 %v699, %v1010
      %v1039 = vadd.f32 %v704, %v1011
      %v1040 = vadd.f32 %v709, %v1012
      %v1041 = vadd.f32 %v714, %v1013
      %v1042 = vadd.f32 %v719, %v1014
      %v1043 = vadd.f32 %v724, %v1015
      %v1044 = vadd.f32 %v729, %v1016
      %v1045 = vadd.f32 %v734, %v1017
      %v1046 = vadd.f32 %v739, %v1018
      %v1047 = vadd.f32 %v744, %v1019
      %v1048 = vadd.f32 %v749, %v1020
      %v1049 = vadd.f32 %v754, %v1021
      %v1050 = vadd.f32 %v759, %v1022
      %v1051 = vadd.f32 %v764, %v1023
      %v1052 = vlaneseq
      %v1053 = vshrl.u32 %v1052, 7
      %v1054 = vsub.s32 0, %v1053
      %v1055 = vrot.slane %v314, %v1054
      %v1056 = vadd.f32 %v1024, %v1055
      %v1057 = vadd.f32 %v1025, %v1055
      %v1058 = vadd.f32 %v1026, %v1055
      %v1059 = vadd.f32 %v1027, %v1055
      %v1060 = vadd.f32 %v1028, %v1055
      %v1061 = vadd.f32 %v1029, %v1055
      %v1062 = vadd.f32 %v1030, %v1055
      %v1063 = vadd.f32 %v1031, %v1055
      %v1064 = vadd.f32 %v1032, %v1055
      %v1065 = vadd.f32 %v1033, %v1055
      %v1066 = vadd.f32 %v1034, %v1055
      %v1067 = vadd.f32 %v1035, %v1055
      %v1068 = vadd.f32 %v1036, %v1055
      %v1069 = vadd.f32 %v1037, %v1055
      %v1070 = vadd.f32 %v1038, %v1055
      %v1071 = vadd.f32 %v1039, %v1055
      %v1072 = vadd.f32 %v1040, %v1055
      %v1073 = vadd.f32 %v1041, %v1055
      %v1074 = vadd.f32 %v1042, %v1055
      %v1075 = vadd.f32 %v1043, %v1055
      %v1076 = vadd.f32 %v1044, %v1055
      %v1077 = vadd.f32 %v1045, %v1055
      %v1078 = vadd.f32 %v1046, %v1055
      %v1079 = vadd.f32 %v1047, %v1055
      %v1080 = vadd.f32 %v1048, %v1055
      %v1081 = vadd.f32 %v1049, %v1055
      %v1082 = vadd.f32 %v1050, %v1055
      %v1083 = vadd.f32 %v1051, %v1055
      %v1084 = vmax.f32 %v1056, 0.0
      %v1085 = vmax.f32 %v1057, 0.0
      %v1086 = vmax.f32 %v1058, 0.0
      %v1087 = vmax.f32 %v1059, 0.0
      %v1088 = vmax.f32 %v1060, 0.0
      %v1089 = vmax.f32 %v1061, 0.0
      %v1090 = vmax.f32 %v1062, 0.0
      %v1091 = vmax.f32 %v1063, 0.0
      %v1092 = vmax.f32 %v1064, 0.0
      %v1093 = vmax.f32 %v1065, 0.0
      %v1094 = vmax.f32 %v1066, 0.0
      %v1095 = vmax.f32 %v1067, 0.0
      %v1096 = vmax.f32 %v1068, 0.0
      %v1097 = vmax.f32 %v1069, 0.0
      %v1098 = vmax.f32 %v1070, 0.0
      %v1099 = vmax.f32 %v1071, 0.0
      %v1100 = vmax.f32 %v1072, 0.0
      %v1101 = vmax.f32 %v1073, 0.0
      %v1102 = vmax.f32 %v1074, 0.0
      %v1103 = vmax.f32 %v1075, 0.0
      %v1104 = vmax.f32 %v1076, 0.0
      %v1105 = vmax.f32 %v1077, 0.0
      %v1106 = vmax.f32 %v1078, 0.0
      %v1107 = vmax.f32 %v1079, 0.0
      %v1108 = vmax.f32 %v1080, 0.0
      %v1109 = vmax.f32 %v1081, 0.0
      %v1110 = vmax.f32 %v1082, 0.0
      %v1111 = vmax.f32 %v1083, 0.0
      %v1112 = vlaneseq
      %v1113 = vshrl.u32 %v1112, 7
      %v1114 = vsub.s32 0, %v1113
      %v1115 = vrot.slane %v315, %v1114
      %v1117 = vsel %vm319, %v1084, 0
      %v1120 = vsel %vm319, %v1085, 0
      %v1123 = vsel %vm319, %v1086, 0
      %v1126 = vsel %vm319, %v1087, 0
      %v1129 = vsel %vm319, %v1088, 0
      %v1132 = vsel %vm319, %v1089, 0
      %v1135 = vsel %vm319, %v1090, 0
      %v1138 = vsel %vm319, %v1091, 0
      %v1141 = vsel %vm319, %v1092, 0
      %v1144 = vsel %vm319, %v1093, 0
      %v1147 = vsel %vm319, %v1094, 0
      %v1150 = vsel %vm319, %v1095, 0
      %v1153 = vsel %vm319, %v1096, 0
      %v1156 = vsel %vm319, %v1097, 0
      %v1159 = vsel %vm319, %v1098, 0
      %v1162 = vsel %vm319, %v1099, 0
      %v1165 = vsel %vm319, %v1100, 0
      %v1168 = vsel %vm319, %v1101, 0
      %v1171 = vsel %vm319, %v1102, 0
      %v1174 = vsel %vm319, %v1103, 0
      %v1177 = vsel %vm319, %v1104, 0
      %v1180 = vsel %vm319, %v1105, 0
      %v1183 = vsel %vm319, %v1106, 0
      %v1186 = vsel %vm319, %v1107, 0
      %v1189 = vsel %vm319, %v1108, 0
      %v1192 = vsel %vm319, %v1109, 0
      %v1195 = vsel %vm319, %v1110, 0
      %v1198 = vsel %vm319, %v1111, 0
      %1200 = vmatprep.subr.mxu0 0.0
      %1201 = vmatpush1.msra.mxu0 0.0
      %1202 = vmatprep.subr.mxu0 0.0
      %1203 = vmatpush1.msra.mxu0 0.0
      %1204 = vmatprep.subr.mxu0 0.0
      %1205 = vmatpush1.msra.mxu0 0.0
      %1206 = vmatprep.subr.mxu0 0.0
      %1207 = vmatpush1.msra.mxu0 0.0
      %1208 = vmatprep.subr.mxu0 0.0
      %1209 = vmatpush1.msra.mxu0 0.0
      %1210 = vmatprep.subr.mxu0 0.0
      %1211 = vmatpush1.msra.mxu0 0.0
      %1212 = vmatprep.subr.mxu0 0.0
      %1213 = vmatpush1.msra.mxu0 0.0
      %1214 = vmatprep.subr.mxu0 0.0
      %1215 = vmatpush1.msra.mxu0 0.0
      %1216 = vmatprep.subr.mxu0 0.0
      %1217 = vmatpush1.msra.mxu0 0.0
      %1218 = vmatprep.subr.mxu0 0.0
      %1219 = vmatpush1.msra.mxu0 0.0
      %1220 = vmatprep.subr.mxu0 0.0
      %1221 = vmatpush1.msra.mxu0 0.0
      %1222 = vmatprep.subr.mxu0 0.0
      %1223 = vmatpush1.msra.mxu0 0.0
      %1224 = vmatprep.subr.mxu0 0.0
      %1225 = vmatpush1.msra.mxu0 %v296
      %1226 = vmatprep.subr.mxu0 0.0
      %1227 = vmatpush1.msra.mxu0 %v295
      %1228 = vmatprep.subr.mxu0 0.0
      %1229 = vmatpush1.msra.mxu0 %v294
      %1230 = vmatprep.subr.mxu0 0.0
      %1231 = vmatpush1.msra.mxu0 %v293
      %1232 = vmatprep.subr.mxu0 0.0
      %1233 = vmatpush2.msra.mxu0 0.0
      %1234 = vmatprep.subr.mxu0 0.0
      %1235 = vmatpush2.msra.mxu0 0.0
      %1236 = vmatprep.subr.mxu0 0.0
      %1237 = vmatpush2.msra.mxu0 0.0
      %1238 = vmatprep.subr.mxu0 0.0
      %1239 = vmatpush2.msra.mxu0 0.0
      %1240 = vmatprep.subr.mxu0 0.0
      %1241 = vmatpush2.msra.mxu0 0.0
      %1242 = vmatprep.subr.mxu0 0.0
      %1243 = vmatpush2.msra.mxu0 0.0
      %1244 = vmatprep.subr.mxu0 0.0
      %1245 = vmatpush2.msra.mxu0 0.0
      %1246 = vmatprep.subr.mxu0 0.0
      %1247 = vmatpush2.msra.mxu0 0.0
      %1248 = vmatprep.subr.mxu0 0.0
      %1249 = vmatpush2.msra.mxu0 0.0
      %1250 = vmatprep.subr.mxu0 0.0
      %1251 = vmatpush2.msra.mxu0 0.0
      %1252 = vmatprep.subr.mxu0 0.0
      %1253 = vmatpush2.msra.mxu0 0.0
      %1254 = vmatprep.subr.mxu0 0.0
      %1255 = vmatpush2.msra.mxu0 0.0
      %1256 = vmatprep.subr.mxu0 0.0
      %1257 = vmatpush2.msra.mxu0 0.0
      %1258 = vmatprep.subr.mxu0 0.0
      %1259 = vmatpush2.msra.mxu0 0.0
      %1260 = vmatprep.subr.mxu0 0.0
      %1261 = vmatpush2.msra.mxu0 0.0
      %1262 = vmatprep.subr.mxu0 0.0
      %1263 = vmatpush2.msra.mxu0 0.0
      %1264 = vmatprep.mubr.f32.mxu0 0.0
      %1265 = vmatmul.mubr.f32.gmra.mxu0 %v1117
      %v1266 = vpop.f32.mrf.mxu0
      %v1267 = vadd.f32 %v1115, %v1266
      %v1268 = vpop.f32.mrf.mxu0
      %1269 = vmatprep.mubr.f32.mxu0 0.0
      %1270 = vmatmul.mubr.f32.gmra.mxu0 %v1120
      %v1271 = vpop.f32.mrf.mxu0
      %v1272 = vadd.f32 %v1115, %v1271
      %v1273 = vpop.f32.mrf.mxu0
      %1274 = vmatprep.mubr.f32.mxu0 0.0
      %1275 = vmatmul.mubr.f32.gmra.mxu0 %v1123
      %v1276 = vpop.f32.mrf.mxu0
      %v1277 = vadd.f32 %v1115, %v1276
      %v1278 = vpop.f32.mrf.mxu0
      %1279 = vmatprep.mubr.f32.mxu0 0.0
      %1280 = vmatmul.mubr.f32.gmra.mxu0 %v1126
      %v1281 = vpop.f32.mrf.mxu0
      %v1282 = vadd.f32 %v1115, %v1281
      %v1283 = vpop.f32.mrf.mxu0
      %1284 = vmatprep.mubr.f32.mxu0 0.0
      %1285 = vmatmul.mubr.f32.gmra.mxu0 %v1129
      %v1286 = vpop.f32.mrf.mxu0
      %v1287 = vadd.f32 %v1115, %v1286
      %v1288 = vpop.f32.mrf.mxu0
      %1289 = vmatprep.mubr.f32.mxu0 0.0
      %1290 = vmatmul.mubr.f32.gmra.mxu0 %v1132
      %v1291 = vpop.f32.mrf.mxu0
      %v1292 = vadd.f32 %v1115, %v1291
      %v1293 = vpop.f32.mrf.mxu0
      %1294 = vmatprep.mubr.f32.mxu0 0.0
      %1295 = vmatmul.mubr.f32.gmra.mxu0 %v1135
      %v1296 = vpop.f32.mrf.mxu0
      %v1297 = vadd.f32 %v1115, %v1296
      %v1298 = vpop.f32.mrf.mxu0
      %1299 = vmatprep.mubr.f32.mxu0 0.0
      %1300 = vmatmul.mubr.f32.gmra.mxu0 %v1138
      %v1301 = vpop.f32.mrf.mxu0
      %v1302 = vadd.f32 %v1115, %v1301
      %v1303 = vpop.f32.mrf.mxu0
      %1304 = vmatprep.mubr.f32.mxu0 0.0
      %1305 = vmatmul.mubr.f32.gmra.mxu0 %v1141
      %v1306 = vpop.f32.mrf.mxu0
      %v1307 = vadd.f32 %v1115, %v1306
      %v1308 = vpop.f32.mrf.mxu0
      %1309 = vmatprep.mubr.f32.mxu0 0.0
      %1310 = vmatmul.mubr.f32.gmra.mxu0 %v1144
      %v1311 = vpop.f32.mrf.mxu0
      %v1312 = vadd.f32 %v1115, %v1311
      %v1313 = vpop.f32.mrf.mxu0
      %1314 = vmatprep.mubr.f32.mxu0 0.0
      %1315 = vmatmul.mubr.f32.gmra.mxu0 %v1147
      %v1316 = vpop.f32.mrf.mxu0
      %v1317 = vadd.f32 %v1115, %v1316
      %v1318 = vpop.f32.mrf.mxu0
      %1319 = vmatprep.mubr.f32.mxu0 0.0
      %1320 = vmatmul.mubr.f32.gmra.mxu0 %v1150
      %v1321 = vpop.f32.mrf.mxu0
      %v1322 = vadd.f32 %v1115, %v1321
      %v1323 = vpop.f32.mrf.mxu0
      %1324 = vmatprep.mubr.f32.mxu0 0.0
      %1325 = vmatmul.mubr.f32.gmra.mxu0 %v1153
      %v1326 = vpop.f32.mrf.mxu0
      %v1327 = vadd.f32 %v1115, %v1326
      %v1328 = vpop.f32.mrf.mxu0
      %1329 = vmatprep.mubr.f32.mxu0 0.0
      %1330 = vmatmul.mubr.f32.gmra.mxu0 %v1156
      %v1331 = vpop.f32.mrf.mxu0
      %v1332 = vadd.f32 %v1115, %v1331
      %v1333 = vpop.f32.mrf.mxu0
      %1334 = vmatprep.mubr.f32.mxu0 0.0
      %1335 = vmatmul.mubr.f32.gmra.mxu0 %v1159
      %v1336 = vpop.f32.mrf.mxu0
      %v1337 = vadd.f32 %v1115, %v1336
      %v1338 = vpop.f32.mrf.mxu0
      %1339 = vmatprep.mubr.f32.mxu0 0.0
      %1340 = vmatmul.mubr.f32.gmra.mxu0 %v1162
      %v1341 = vpop.f32.mrf.mxu0
      %v1342 = vadd.f32 %v1115, %v1341
      %v1343 = vpop.f32.mrf.mxu0
      %1344 = vmatprep.mubr.f32.mxu0 0.0
      %1345 = vmatmul.mubr.f32.gmra.mxu0 %v1165
      %v1346 = vpop.f32.mrf.mxu0
      %v1347 = vadd.f32 %v1115, %v1346
      %v1348 = vpop.f32.mrf.mxu0
      %1349 = vmatprep.mubr.f32.mxu0 0.0
      %1350 = vmatmul.mubr.f32.gmra.mxu0 %v1168
      %v1351 = vpop.f32.mrf.mxu0
      %v1352 = vadd.f32 %v1115, %v1351
      %v1353 = vpop.f32.mrf.mxu0
      %1354 = vmatprep.mubr.f32.mxu0 0.0
      %1355 = vmatmul.mubr.f32.gmra.mxu0 %v1171
      %v1356 = vpop.f32.mrf.mxu0
      %v1357 = vadd.f32 %v1115, %v1356
      %v1358 = vpop.f32.mrf.mxu0
      %1359 = vmatprep.mubr.f32.mxu0 0.0
      %1360 = vmatmul.mubr.f32.gmra.mxu0 %v1174
      %v1361 = vpop.f32.mrf.mxu0
      %v1362 = vadd.f32 %v1115, %v1361
      %v1363 = vpop.f32.mrf.mxu0
      %1364 = vmatprep.mubr.f32.mxu0 0.0
      %1365 = vmatmul.mubr.f32.gmra.mxu0 %v1177
      %v1366 = vpop.f32.mrf.mxu0
      %v1367 = vadd.f32 %v1115, %v1366
      %v1368 = vpop.f32.mrf.mxu0
      %1369 = vmatprep.mubr.f32.mxu0 0.0
      %1370 = vmatmul.mubr.f32.gmra.mxu0 %v1180
      %v1371 = vpop.f32.mrf.mxu0
      %v1372 = vadd.f32 %v1115, %v1371
      %v1373 = vpop.f32.mrf.mxu0
      %1374 = vmatprep.mubr.f32.mxu0 0.0
      %1375 = vmatmul.mubr.f32.gmra.mxu0 %v1183
      %v1376 = vpop.f32.mrf.mxu0
      %v1377 = vadd.f32 %v1115, %v1376
      %v1378 = vpop.f32.mrf.mxu0
      %1379 = vmatprep.mubr.f32.mxu0 0.0
      %1380 = vmatmul.mubr.f32.gmra.mxu0 %v1186
      %v1381 = vpop.f32.mrf.mxu0
      %v1382 = vadd.f32 %v1115, %v1381
      %v1383 = vpop.f32.mrf.mxu0
      %1384 = vmatprep.mubr.f32.mxu0 0.0
      %1385 = vmatmul.mubr.f32.gmra.mxu0 %v1189
      %v1386 = vpop.f32.mrf.mxu0
      %v1387 = vadd.f32 %v1115, %v1386
      %v1388 = vpop.f32.mrf.mxu0
      %1389 = vmatprep.mubr.f32.mxu0 0.0
      %1390 = vmatmul.mubr.f32.gmra.mxu0 %v1192
      %v1391 = vpop.f32.mrf.mxu0
      %v1392 = vadd.f32 %v1115, %v1391
      %v1393 = vpop.f32.mrf.mxu0
      %1394 = vmatprep.mubr.f32.mxu0 0.0
      %1395 = vmatmul.mubr.f32.gmra.mxu0 %v1195
      %v1396 = vpop.f32.mrf.mxu0
      %v1397 = vadd.f32 %v1115, %v1396
      %v1398 = vpop.f32.mrf.mxu0
      %1399 = vmatprep.mubr.f32.mxu0 0.0
      %1400 = vmatmul.mubr.f32.gmra.mxu0 %v1198
      %v1401 = vpop.f32.mrf.mxu0
      %v1402 = vadd.f32 %v1115, %v1401
      %v1403 = vpop.f32.mrf.mxu0
      %1404 = vdwg.mxu0
      %v1405 = vmax.f32 %v1267, 0.0
      %v1406 = vmax.f32 %v1272, 0.0
      %v1407 = vmax.f32 %v1277, 0.0
      %v1408 = vmax.f32 %v1282, 0.0
      %v1409 = vmax.f32 %v1287, 0.0
      %v1410 = vmax.f32 %v1292, 0.0
      %v1411 = vmax.f32 %v1297, 0.0
      %v1412 = vmax.f32 %v1302, 0.0
      %v1413 = vmax.f32 %v1307, 0.0
      %v1414 = vmax.f32 %v1312, 0.0
      %v1415 = vmax.f32 %v1317, 0.0
      %v1416 = vmax.f32 %v1322, 0.0
      %v1417 = vmax.f32 %v1327, 0.0
      %v1418 = vmax.f32 %v1332, 0.0
      %v1419 = vmax.f32 %v1337, 0.0
      %v1420 = vmax.f32 %v1342, 0.0
      %v1421 = vmax.f32 %v1347, 0.0
      %v1422 = vmax.f32 %v1352, 0.0
      %v1423 = vmax.f32 %v1357, 0.0
      %v1424 = vmax.f32 %v1362, 0.0
      %v1425 = vmax.f32 %v1367, 0.0
      %v1426 = vmax.f32 %v1372, 0.0
      %v1427 = vmax.f32 %v1377, 0.0
      %v1428 = vmax.f32 %v1382, 0.0
      %v1429 = vmax.f32 %v1387, 0.0
      %v1430 = vmax.f32 %v1392, 0.0
      %v1431 = vmax.f32 %v1397, 0.0
      %v1432 = vmax.f32 %v1402, 0.0
      %v1433 = vlaneseq
      %v1434 = vshrl.u32 %v1433, 7
      %v1435 = vsub.s32 0, %v1434
      %v1436 = vrot.slane %v316, %v1435
      %v1438 = vsel %vm319, %v1405, 0
      %v1441 = vsel %vm319, %v1406, 0
      %v1444 = vsel %vm319, %v1407, 0
      %v1447 = vsel %vm319, %v1408, 0
      %v1450 = vsel %vm319, %v1409, 0
      %v1453 = vsel %vm319, %v1410, 0
      %v1456 = vsel %vm319, %v1411, 0
      %v1459 = vsel %vm319, %v1412, 0
      %v1462 = vsel %vm319, %v1413, 0
      %v1465 = vsel %vm319, %v1414, 0
      %v1468 = vsel %vm319, %v1415, 0
      %v1471 = vsel %vm319, %v1416, 0
      %v1474 = vsel %vm319, %v1417, 0
      %v1477 = vsel %vm319, %v1418, 0
      %v1480 = vsel %vm319, %v1419, 0
      %v1483 = vsel %vm319, %v1420, 0
      %v1486 = vsel %vm319, %v1421, 0
      %v1489 = vsel %vm319, %v1422, 0
      %v1492 = vsel %vm319, %v1423, 0
      %v1495 = vsel %vm319, %v1424, 0
      %v1498 = vsel %vm319, %v1425, 0
      %v1501 = vsel %vm319, %v1426, 0
      %v1504 = vsel %vm319, %v1427, 0
      %v1507 = vsel %vm319, %v1428, 0
      %v1510 = vsel %vm319, %v1429, 0
      %v1513 = vsel %vm319, %v1430, 0
      %v1516 = vsel %vm319, %v1431, 0
      %v1519 = vsel %vm319, %v1432, 0
      %1521 = vmatprep.subr.mxu0 0.0
      %1522 = vmatpush1.msra.mxu0 0.0
      %1523 = vmatprep.subr.mxu0 0.0
      %1524 = vmatpush1.msra.mxu0 0.0
      %1525 = vmatprep.subr.mxu0 0.0
      %1526 = vmatpush1.msra.mxu0 0.0
      %1527 = vmatprep.subr.mxu0 0.0
      %1528 = vmatpush1.msra.mxu0 0.0
      %1529 = vmatprep.subr.mxu0 0.0
      %1530 = vmatpush1.msra.mxu0 0.0
      %1531 = vmatprep.subr.mxu0 0.0
      %1532 = vmatpush1.msra.mxu0 0.0
      %1533 = vmatprep.subr.mxu0 0.0
      %1534 = vmatpush1.msra.mxu0 0.0
      %1535 = vmatprep.subr.mxu0 0.0
      %1536 = vmatpush1.msra.mxu0 0.0
      %1537 = vmatprep.subr.mxu0 0.0
      %1538 = vmatpush1.msra.mxu0 0.0
      %1539 = vmatprep.subr.mxu0 0.0
      %1540 = vmatpush1.msra.mxu0 0.0
      %1541 = vmatprep.subr.mxu0 0.0
      %1542 = vmatpush1.msra.mxu0 0.0
      %1543 = vmatprep.subr.mxu0 0.0
      %1544 = vmatpush1.msra.mxu0 0.0
      %1545 = vmatprep.subr.mxu0 0.0
      %1546 = vmatpush1.msra.mxu0 %v300
      %1547 = vmatprep.subr.mxu0 0.0
      %1548 = vmatpush1.msra.mxu0 %v299
      %1549 = vmatprep.subr.mxu0 0.0
      %1550 = vmatpush1.msra.mxu0 %v298
      %1551 = vmatprep.subr.mxu0 0.0
      %1552 = vmatpush1.msra.mxu0 %v297
      %1553 = vmatprep.subr.mxu0 0.0
      %1554 = vmatpush2.msra.mxu0 0.0
      %1555 = vmatprep.subr.mxu0 0.0
      %1556 = vmatpush2.msra.mxu0 0.0
      %1557 = vmatprep.subr.mxu0 0.0
      %1558 = vmatpush2.msra.mxu0 0.0
      %1559 = vmatprep.subr.mxu0 0.0
      %1560 = vmatpush2.msra.mxu0 0.0
      %1561 = vmatprep.subr.mxu0 0.0
      %1562 = vmatpush2.msra.mxu0 0.0
      %1563 = vmatprep.subr.mxu0 0.0
      %1564 = vmatpush2.msra.mxu0 0.0
      %1565 = vmatprep.subr.mxu0 0.0
      %1566 = vmatpush2.msra.mxu0 0.0
      %1567 = vmatprep.subr.mxu0 0.0
      %1568 = vmatpush2.msra.mxu0 0.0
      %1569 = vmatprep.subr.mxu0 0.0
      %1570 = vmatpush2.msra.mxu0 0.0
      %1571 = vmatprep.subr.mxu0 0.0
      %1572 = vmatpush2.msra.mxu0 0.0
      %1573 = vmatprep.subr.mxu0 0.0
      %1574 = vmatpush2.msra.mxu0 0.0
      %1575 = vmatprep.subr.mxu0 0.0
      %1576 = vmatpush2.msra.mxu0 0.0
      %1577 = vmatprep.subr.mxu0 0.0
      %1578 = vmatpush2.msra.mxu0 0.0
      %1579 = vmatprep.subr.mxu0 0.0
      %1580 = vmatpush2.msra.mxu0 0.0
      %1581 = vmatprep.subr.mxu0 0.0
      %1582 = vmatpush2.msra.mxu0 0.0
      %1583 = vmatprep.subr.mxu0 0.0
      %1584 = vmatpush2.msra.mxu0 0.0
      %1585 = vmatprep.mubr.f32.mxu0 0.0
      %1586 = vmatmul.mubr.f32.gmra.mxu0 %v1438
      %v1587 = vpop.f32.mrf.mxu0
      %v1588 = vadd.f32 %v1436, %v1587
      %v1589 = vpop.f32.mrf.mxu0
      %1590 = vmatprep.mubr.f32.mxu0 0.0
      %1591 = vmatmul.mubr.f32.gmra.mxu0 %v1441
      %v1592 = vpop.f32.mrf.mxu0
      %v1593 = vadd.f32 %v1436, %v1592
      %v1594 = vpop.f32.mrf.mxu0
      %1595 = vmatprep.mubr.f32.mxu0 0.0
      %1596 = vmatmul.mubr.f32.gmra.mxu0 %v1444
      %v1597 = vpop.f32.mrf.mxu0
      %v1598 = vadd.f32 %v1436, %v1597
      %v1599 = vpop.f32.mrf.mxu0
      %1600 = vmatprep.mubr.f32.mxu0 0.0
      %1601 = vmatmul.mubr.f32.gmra.mxu0 %v1447
      %v1602 = vpop.f32.mrf.mxu0
      %v1603 = vadd.f32 %v1436, %v1602
      %v1604 = vpop.f32.mrf.mxu0
      %1605 = vmatprep.mubr.f32.mxu0 0.0
      %1606 = vmatmul.mubr.f32.gmra.mxu0 %v1450
      %v1607 = vpop.f32.mrf.mxu0
      %v1608 = vadd.f32 %v1436, %v1607
      %v1609 = vpop.f32.mrf.mxu0
      %1610 = vmatprep.mubr.f32.mxu0 0.0
      %1611 = vmatmul.mubr.f32.gmra.mxu0 %v1453
      %v1612 = vpop.f32.mrf.mxu0
      %v1613 = vadd.f32 %v1436, %v1612
      %v1614 = vpop.f32.mrf.mxu0
      %1615 = vmatprep.mubr.f32.mxu0 0.0
      %1616 = vmatmul.mubr.f32.gmra.mxu0 %v1456
      %v1617 = vpop.f32.mrf.mxu0
      %v1618 = vadd.f32 %v1436, %v1617
      %v1619 = vpop.f32.mrf.mxu0
      %1620 = vmatprep.mubr.f32.mxu0 0.0
      %1621 = vmatmul.mubr.f32.gmra.mxu0 %v1459
      %v1622 = vpop.f32.mrf.mxu0
      %v1623 = vadd.f32 %v1436, %v1622
      %v1624 = vpop.f32.mrf.mxu0
      %1625 = vmatprep.mubr.f32.mxu0 0.0
      %1626 = vmatmul.mubr.f32.gmra.mxu0 %v1462
      %v1627 = vpop.f32.mrf.mxu0
      %v1628 = vadd.f32 %v1436, %v1627
      %v1629 = vpop.f32.mrf.mxu0
      %1630 = vmatprep.mubr.f32.mxu0 0.0
      %1631 = vmatmul.mubr.f32.gmra.mxu0 %v1465
      %v1632 = vpop.f32.mrf.mxu0
      %v1633 = vadd.f32 %v1436, %v1632
      %v1634 = vpop.f32.mrf.mxu0
      %1635 = vmatprep.mubr.f32.mxu0 0.0
      %1636 = vmatmul.mubr.f32.gmra.mxu0 %v1468
      %v1637 = vpop.f32.mrf.mxu0
      %v1638 = vadd.f32 %v1436, %v1637
      %v1639 = vpop.f32.mrf.mxu0
      %1640 = vmatprep.mubr.f32.mxu0 0.0
      %1641 = vmatmul.mubr.f32.gmra.mxu0 %v1471
      %v1642 = vpop.f32.mrf.mxu0
      %v1643 = vadd.f32 %v1436, %v1642
      %v1644 = vpop.f32.mrf.mxu0
      %1645 = vmatprep.mubr.f32.mxu0 0.0
      %1646 = vmatmul.mubr.f32.gmra.mxu0 %v1474
      %v1647 = vpop.f32.mrf.mxu0
      %v1648 = vadd.f32 %v1436, %v1647
      %v1649 = vpop.f32.mrf.mxu0
      %1650 = vmatprep.mubr.f32.mxu0 0.0
      %1651 = vmatmul.mubr.f32.gmra.mxu0 %v1477
      %v1652 = vpop.f32.mrf.mxu0
      %v1653 = vadd.f32 %v1436, %v1652
      %v1654 = vpop.f32.mrf.mxu0
      %1655 = vmatprep.mubr.f32.mxu0 0.0
      %1656 = vmatmul.mubr.f32.gmra.mxu0 %v1480
      %v1657 = vpop.f32.mrf.mxu0
      %v1658 = vadd.f32 %v1436, %v1657
      %v1659 = vpop.f32.mrf.mxu0
      %1660 = vmatprep.mubr.f32.mxu0 0.0
      %1661 = vmatmul.mubr.f32.gmra.mxu0 %v1483
      %v1662 = vpop.f32.mrf.mxu0
      %v1663 = vadd.f32 %v1436, %v1662
      %v1664 = vpop.f32.mrf.mxu0
      %1665 = vmatprep.mubr.f32.mxu0 0.0
      %1666 = vmatmul.mubr.f32.gmra.mxu0 %v1486
      %v1667 = vpop.f32.mrf.mxu0
      %v1668 = vadd.f32 %v1436, %v1667
      %v1669 = vpop.f32.mrf.mxu0
      %1670 = vmatprep.mubr.f32.mxu0 0.0
      %1671 = vmatmul.mubr.f32.gmra.mxu0 %v1489
      %v1672 = vpop.f32.mrf.mxu0
      %v1673 = vadd.f32 %v1436, %v1672
      %v1674 = vpop.f32.mrf.mxu0
      %1675 = vmatprep.mubr.f32.mxu0 0.0
      %1676 = vmatmul.mubr.f32.gmra.mxu0 %v1492
      %v1677 = vpop.f32.mrf.mxu0
      %v1678 = vadd.f32 %v1436, %v1677
      %v1679 = vpop.f32.mrf.mxu0
      %1680 = vmatprep.mubr.f32.mxu0 0.0
      %1681 = vmatmul.mubr.f32.gmra.mxu0 %v1495
      %v1682 = vpop.f32.mrf.mxu0
      %v1683 = vadd.f32 %v1436, %v1682
      %v1684 = vpop.f32.mrf.mxu0
      %1685 = vmatprep.mubr.f32.mxu0 0.0
      %1686 = vmatmul.mubr.f32.gmra.mxu0 %v1498
      %v1687 = vpop.f32.mrf.mxu0
      %v1688 = vadd.f32 %v1436, %v1687
      %v1689 = vpop.f32.mrf.mxu0
      %1690 = vmatprep.mubr.f32.mxu0 0.0
      %1691 = vmatmul.mubr.f32.gmra.mxu0 %v1501
      %v1692 = vpop.f32.mrf.mxu0
      %v1693 = vadd.f32 %v1436, %v1692
      %v1694 = vpop.f32.mrf.mxu0
      %1695 = vmatprep.mubr.f32.mxu0 0.0
      %1696 = vmatmul.mubr.f32.gmra.mxu0 %v1504
      %v1697 = vpop.f32.mrf.mxu0
      %v1698 = vadd.f32 %v1436, %v1697
      %v1699 = vpop.f32.mrf.mxu0
      %1700 = vmatprep.mubr.f32.mxu0 0.0
      %1701 = vmatmul.mubr.f32.gmra.mxu0 %v1507
      %v1702 = vpop.f32.mrf.mxu0
      %v1703 = vadd.f32 %v1436, %v1702
      %v1704 = vpop.f32.mrf.mxu0
      %1705 = vmatprep.mubr.f32.mxu0 0.0
      %1706 = vmatmul.mubr.f32.gmra.mxu0 %v1510
      %v1707 = vpop.f32.mrf.mxu0
      %v1708 = vadd.f32 %v1436, %v1707
      %v1709 = vpop.f32.mrf.mxu0
      %1710 = vmatprep.mubr.f32.mxu0 0.0
      %1711 = vmatmul.mubr.f32.gmra.mxu0 %v1513
      %v1712 = vpop.f32.mrf.mxu0
      %v1713 = vadd.f32 %v1436, %v1712
      %v1714 = vpop.f32.mrf.mxu0
      %1715 = vmatprep.mubr.f32.mxu0 0.0
      %1716 = vmatmul.mubr.f32.gmra.mxu0 %v1516
      %v1717 = vpop.f32.mrf.mxu0
      %v1718 = vadd.f32 %v1436, %v1717
      %v1719 = vpop.f32.mrf.mxu0
      %1720 = vmatprep.mubr.f32.mxu0 0.0
      %1721 = vmatmul.mubr.f32.gmra.mxu0 %v1519
      %v1722 = vpop.f32.mrf.mxu0
      %v1723 = vadd.f32 %v1436, %v1722
      %v1724 = vpop.f32.mrf.mxu0
      %1725 = vdwg.mxu0
      %v1726 = vmax.f32 %v1588, 0.0
      %v1727 = vmax.f32 %v1593, 0.0
      %v1728 = vmax.f32 %v1598, 0.0
      %v1729 = vmax.f32 %v1603, 0.0
      %v1730 = vmax.f32 %v1608, 0.0
      %v1731 = vmax.f32 %v1613, 0.0
      %v1732 = vmax.f32 %v1618, 0.0
      %v1733 = vmax.f32 %v1623, 0.0
      %v1734 = vmax.f32 %v1628, 0.0
      %v1735 = vmax.f32 %v1633, 0.0
      %v1736 = vmax.f32 %v1638, 0.0
      %v1737 = vmax.f32 %v1643, 0.0
      %v1738 = vmax.f32 %v1648, 0.0
      %v1739 = vmax.f32 %v1653, 0.0
      %v1740 = vmax.f32 %v1658, 0.0
      %v1741 = vmax.f32 %v1663, 0.0
      %v1742 = vmax.f32 %v1668, 0.0
      %v1743 = vmax.f32 %v1673, 0.0
      %v1744 = vmax.f32 %v1678, 0.0
      %v1745 = vmax.f32 %v1683, 0.0
      %v1746 = vmax.f32 %v1688, 0.0
      %v1747 = vmax.f32 %v1693, 0.0
      %v1748 = vmax.f32 %v1698, 0.0
      %v1749 = vmax.f32 %v1703, 0.0
      %v1750 = vmax.f32 %v1708, 0.0
      %v1751 = vmax.f32 %v1713, 0.0
      %v1752 = vmax.f32 %v1718, 0.0
      %v1753 = vmax.f32 %v1723, 0.0
      %v1755 = vsel %vm319, %v1726, 0
      %v1758 = vsel %vm319, %v1727, 0
      %v1761 = vsel %vm319, %v1728, 0
      %v1764 = vsel %vm319, %v1729, 0
      %v1767 = vsel %vm319, %v1730, 0
      %v1770 = vsel %vm319, %v1731, 0
      %v1773 = vsel %vm319, %v1732, 0
      %v1776 = vsel %vm319, %v1733, 0
      %v1779 = vsel %vm319, %v1734, 0
      %v1782 = vsel %vm319, %v1735, 0
      %v1785 = vsel %vm319, %v1736, 0
      %v1788 = vsel %vm319, %v1737, 0
      %v1791 = vsel %vm319, %v1738, 0
      %v1794 = vsel %vm319, %v1739, 0
      %v1797 = vsel %vm319, %v1740, 0
      %v1800 = vsel %vm319, %v1741, 0
      %v1803 = vsel %vm319, %v1742, 0
      %v1806 = vsel %vm319, %v1743, 0
      %v1809 = vsel %vm319, %v1744, 0
      %v1812 = vsel %vm319, %v1745, 0
      %v1815 = vsel %vm319, %v1746, 0
      %v1818 = vsel %vm319, %v1747, 0
      %v1821 = vsel %vm319, %v1748, 0
      %v1824 = vsel %vm319, %v1749, 0
      %v1827 = vsel %vm319, %v1750, 0
      %v1830 = vsel %vm319, %v1751, 0
      %v1833 = vsel %vm319, %v1752, 0
      %v1836 = vsel %vm319, %v1753, 0
      %1838 = vmatprep.subr.mxu0 0.0
      %1839 = vmatpush1.msra.mxu0 0.0
      %1840 = vmatprep.subr.mxu0 0.0
      %1841 = vmatpush1.msra.mxu0 0.0
      %1842 = vmatprep.subr.mxu0 0.0
      %1843 = vmatpush1.msra.mxu0 0.0
      %1844 = vmatprep.subr.mxu0 0.0
      %1845 = vmatpush1.msra.mxu0 0.0
      %1846 = vmatprep.subr.mxu0 0.0
      %1847 = vmatpush1.msra.mxu0 0.0
      %1848 = vmatprep.subr.mxu0 0.0
      %1849 = vmatpush1.msra.mxu0 0.0
      %1850 = vmatprep.subr.mxu0 0.0
      %1851 = vmatpush1.msra.mxu0 0.0
      %1852 = vmatprep.subr.mxu0 0.0
      %1853 = vmatpush1.msra.mxu0 0.0
      %1854 = vmatprep.subr.mxu0 0.0
      %1855 = vmatpush1.msra.mxu0 0.0
      %1856 = vmatprep.subr.mxu0 0.0
      %1857 = vmatpush1.msra.mxu0 0.0
      %1858 = vmatprep.subr.mxu0 0.0
      %1859 = vmatpush1.msra.mxu0 0.0
      %1860 = vmatprep.subr.mxu0 0.0
      %1861 = vmatpush1.msra.mxu0 0.0
      %1862 = vmatprep.subr.mxu0 0.0
      %1863 = vmatpush1.msra.mxu0 %v312
      %1864 = vmatprep.subr.mxu0 0.0
      %1865 = vmatpush1.msra.mxu0 %v311
      %1866 = vmatprep.subr.mxu0 0.0
      %1867 = vmatpush1.msra.mxu0 %v310
      %1868 = vmatprep.subr.mxu0 0.0
      %1869 = vmatpush1.msra.mxu0 %v309
      %1870 = vmatprep.subr.mxu0 0.0
      %1871 = vmatpush2.msra.mxu0 0.0
      %1872 = vmatprep.subr.mxu0 0.0
      %1873 = vmatpush2.msra.mxu0 0.0
      %1874 = vmatprep.subr.mxu0 0.0
      %1875 = vmatpush2.msra.mxu0 0.0
      %1876 = vmatprep.subr.mxu0 0.0
      %1877 = vmatpush2.msra.mxu0 0.0
      %1878 = vmatprep.subr.mxu0 0.0
      %1879 = vmatpush2.msra.mxu0 0.0
      %1880 = vmatprep.subr.mxu0 0.0
      %1881 = vmatpush2.msra.mxu0 0.0
      %1882 = vmatprep.subr.mxu0 0.0
      %1883 = vmatpush2.msra.mxu0 0.0
      %1884 = vmatprep.subr.mxu0 0.0
      %1885 = vmatpush2.msra.mxu0 0.0
      %1886 = vmatprep.subr.mxu0 0.0
      %1887 = vmatpush2.msra.mxu0 0.0
      %1888 = vmatprep.subr.mxu0 0.0
      %1889 = vmatpush2.msra.mxu0 0.0
      %1890 = vmatprep.subr.mxu0 0.0
      %1891 = vmatpush2.msra.mxu0 0.0
      %1892 = vmatprep.subr.mxu0 0.0
      %1893 = vmatpush2.msra.mxu0 0.0
      %1894 = vmatprep.subr.mxu0 0.0
      %1895 = vmatpush2.msra.mxu0 0.0
      %1896 = vmatprep.subr.mxu0 0.0
      %1897 = vmatpush2.msra.mxu0 0.0
      %1898 = vmatprep.subr.mxu0 0.0
      %1899 = vmatpush2.msra.mxu0 0.0
      %1900 = vmatprep.subr.mxu0 0.0
      %1901 = vmatpush2.msra.mxu0 0.0
      %1902 = vmatprep.mubr.f32.mxu0 0.0
      %1903 = vmatmul.mubr.f32.gmra.mxu0 %v1755
      %v1904 = vpop.f32.mrf.mxu0
      %v1905 = vadd.f32 0.0, %v1904
      %v1906 = vpop.f32.mrf.mxu0
      %1907 = vmatprep.mubr.f32.mxu0 0.0
      %1908 = vmatmul.mubr.f32.gmra.mxu0 %v1758
      %v1909 = vpop.f32.mrf.mxu0
      %v1910 = vadd.f32 0.0, %v1909
      %v1911 = vpop.f32.mrf.mxu0
      %1912 = vmatprep.mubr.f32.mxu0 0.0
      %1913 = vmatmul.mubr.f32.gmra.mxu0 %v1761
      %v1914 = vpop.f32.mrf.mxu0
      %v1915 = vadd.f32 0.0, %v1914
      %v1916 = vpop.f32.mrf.mxu0
      %1917 = vmatprep.mubr.f32.mxu0 0.0
      %1918 = vmatmul.mubr.f32.gmra.mxu0 %v1764
      %v1919 = vpop.f32.mrf.mxu0
      %v1920 = vadd.f32 0.0, %v1919
      %v1921 = vpop.f32.mrf.mxu0
      %1922 = vmatprep.mubr.f32.mxu0 0.0
      %1923 = vmatmul.mubr.f32.gmra.mxu0 %v1767
      %v1924 = vpop.f32.mrf.mxu0
      %v1925 = vadd.f32 0.0, %v1924
      %v1926 = vpop.f32.mrf.mxu0
      %1927 = vmatprep.mubr.f32.mxu0 0.0
      %1928 = vmatmul.mubr.f32.gmra.mxu0 %v1770
      %v1929 = vpop.f32.mrf.mxu0
      %v1930 = vadd.f32 0.0, %v1929
      %v1931 = vpop.f32.mrf.mxu0
      %1932 = vmatprep.mubr.f32.mxu0 0.0
      %1933 = vmatmul.mubr.f32.gmra.mxu0 %v1773
      %v1934 = vpop.f32.mrf.mxu0
      %v1935 = vadd.f32 0.0, %v1934
      %v1936 = vpop.f32.mrf.mxu0
      %1937 = vmatprep.mubr.f32.mxu0 0.0
      %1938 = vmatmul.mubr.f32.gmra.mxu0 %v1776
      %v1939 = vpop.f32.mrf.mxu0
      %v1940 = vadd.f32 0.0, %v1939
      %v1941 = vpop.f32.mrf.mxu0
      %1942 = vmatprep.mubr.f32.mxu0 0.0
      %1943 = vmatmul.mubr.f32.gmra.mxu0 %v1779
      %v1944 = vpop.f32.mrf.mxu0
      %v1945 = vadd.f32 0.0, %v1944
      %v1946 = vpop.f32.mrf.mxu0
      %1947 = vmatprep.mubr.f32.mxu0 0.0
      %1948 = vmatmul.mubr.f32.gmra.mxu0 %v1782
      %v1949 = vpop.f32.mrf.mxu0
      %v1950 = vadd.f32 0.0, %v1949
      %v1951 = vpop.f32.mrf.mxu0
      %1952 = vmatprep.mubr.f32.mxu0 0.0
      %1953 = vmatmul.mubr.f32.gmra.mxu0 %v1785
      %v1954 = vpop.f32.mrf.mxu0
      %v1955 = vadd.f32 0.0, %v1954
      %v1956 = vpop.f32.mrf.mxu0
      %1957 = vmatprep.mubr.f32.mxu0 0.0
      %1958 = vmatmul.mubr.f32.gmra.mxu0 %v1788
      %v1959 = vpop.f32.mrf.mxu0
      %v1960 = vadd.f32 0.0, %v1959
      %v1961 = vpop.f32.mrf.mxu0
      %1962 = vmatprep.mubr.f32.mxu0 0.0
      %1963 = vmatmul.mubr.f32.gmra.mxu0 %v1791
      %v1964 = vpop.f32.mrf.mxu0
      %v1965 = vadd.f32 0.0, %v1964
      %v1966 = vpop.f32.mrf.mxu0
      %1967 = vmatprep.mubr.f32.mxu0 0.0
      %1968 = vmatmul.mubr.f32.gmra.mxu0 %v1794
      %v1969 = vpop.f32.mrf.mxu0
      %v1970 = vadd.f32 0.0, %v1969
      %v1971 = vpop.f32.mrf.mxu0
      %1972 = vmatprep.mubr.f32.mxu0 0.0
      %1973 = vmatmul.mubr.f32.gmra.mxu0 %v1797
      %v1974 = vpop.f32.mrf.mxu0
      %v1975 = vadd.f32 0.0, %v1974
      %v1976 = vpop.f32.mrf.mxu0
      %1977 = vmatprep.mubr.f32.mxu0 0.0
      %1978 = vmatmul.mubr.f32.gmra.mxu0 %v1800
      %v1979 = vpop.f32.mrf.mxu0
      %v1980 = vadd.f32 0.0, %v1979
      %v1981 = vpop.f32.mrf.mxu0
      %1982 = vmatprep.mubr.f32.mxu0 0.0
      %1983 = vmatmul.mubr.f32.gmra.mxu0 %v1803
      %v1984 = vpop.f32.mrf.mxu0
      %v1985 = vadd.f32 0.0, %v1984
      %v1986 = vpop.f32.mrf.mxu0
      %1987 = vmatprep.mubr.f32.mxu0 0.0
      %1988 = vmatmul.mubr.f32.gmra.mxu0 %v1806
      %v1989 = vpop.f32.mrf.mxu0
      %v1990 = vadd.f32 0.0, %v1989
      %v1991 = vpop.f32.mrf.mxu0
      %1992 = vmatprep.mubr.f32.mxu0 0.0
      %1993 = vmatmul.mubr.f32.gmra.mxu0 %v1809
      %v1994 = vpop.f32.mrf.mxu0
      %v1995 = vadd.f32 0.0, %v1994
      %v1996 = vpop.f32.mrf.mxu0
      %1997 = vmatprep.mubr.f32.mxu0 0.0
      %1998 = vmatmul.mubr.f32.gmra.mxu0 %v1812
      %v1999 = vpop.f32.mrf.mxu0
      %v2000 = vadd.f32 0.0, %v1999
      %v2001 = vpop.f32.mrf.mxu0
      %2002 = vmatprep.mubr.f32.mxu0 0.0
      %2003 = vmatmul.mubr.f32.gmra.mxu0 %v1815
      %v2004 = vpop.f32.mrf.mxu0
      %v2005 = vadd.f32 0.0, %v2004
      %v2006 = vpop.f32.mrf.mxu0
      %2007 = vmatprep.mubr.f32.mxu0 0.0
      %2008 = vmatmul.mubr.f32.gmra.mxu0 %v1818
      %v2009 = vpop.f32.mrf.mxu0
      %v2010 = vadd.f32 0.0, %v2009
      %v2011 = vpop.f32.mrf.mxu0
      %2012 = vmatprep.mubr.f32.mxu0 0.0
      %2013 = vmatmul.mubr.f32.gmra.mxu0 %v1821
      %v2014 = vpop.f32.mrf.mxu0
      %v2015 = vadd.f32 0.0, %v2014
      %v2016 = vpop.f32.mrf.mxu0
      %2017 = vmatprep.mubr.f32.mxu0 0.0
      %2018 = vmatmul.mubr.f32.gmra.mxu0 %v1824
      %v2019 = vpop.f32.mrf.mxu0
      %v2020 = vadd.f32 0.0, %v2019
      %v2021 = vpop.f32.mrf.mxu0
      %2022 = vmatprep.mubr.f32.mxu0 0.0
      %2023 = vmatmul.mubr.f32.gmra.mxu0 %v1827
      %v2024 = vpop.f32.mrf.mxu0
      %v2025 = vadd.f32 0.0, %v2024
      %v2026 = vpop.f32.mrf.mxu0
      %2027 = vmatprep.mubr.f32.mxu0 0.0
      %2028 = vmatmul.mubr.f32.gmra.mxu0 %v1830
      %v2029 = vpop.f32.mrf.mxu0
      %v2030 = vadd.f32 0.0, %v2029
      %v2031 = vpop.f32.mrf.mxu0
      %2032 = vmatprep.mubr.f32.mxu0 0.0
      %2033 = vmatmul.mubr.f32.gmra.mxu0 %v1833
      %v2034 = vpop.f32.mrf.mxu0
      %v2035 = vadd.f32 0.0, %v2034
      %v2036 = vpop.f32.mrf.mxu0
      %2037 = vmatprep.mubr.f32.mxu0 0.0
      %2038 = vmatmul.mubr.f32.gmra.mxu0 %v1836
      %v2039 = vpop.f32.mrf.mxu0
      %v2040 = vadd.f32 0.0, %v2039
      %v2041 = vpop.f32.mrf.mxu0
      %2042 = vdwg.mxu0
      %2044 = vset.pattern.permute.xlu0 0
      %2045 = vperm.xlu0 %2044, %v1905
      %v2046 = vpop.permute.xlu0 %2045
      %2049 = vset.pattern.permute.xlu0 0
      %2050 = vperm.xlu0 %2049, %v1910
      %v2051 = vpop.permute.xlu0 %2050
      %2054 = vset.pattern.permute.xlu0 0
      %2055 = vperm.xlu0 %2054, %v1915
      %v2056 = vpop.permute.xlu0 %2055
      %2059 = vset.pattern.permute.xlu0 0
      %2060 = vperm.xlu0 %2059, %v1920
      %v2061 = vpop.permute.xlu0 %2060
      %2064 = vset.pattern.permute.xlu0 0
      %2065 = vperm.xlu0 %2064, %v1925
      %v2066 = vpop.permute.xlu0 %2065
      %2069 = vset.pattern.permute.xlu0 0
      %2070 = vperm.xlu0 %2069, %v1930
      %v2071 = vpop.permute.xlu0 %2070
      %2074 = vset.pattern.permute.xlu0 0
      %2075 = vperm.xlu0 %2074, %v1935
      %v2076 = vpop.permute.xlu0 %2075
      %2079 = vset.pattern.permute.xlu0 0
      %2080 = vperm.xlu0 %2079, %v1940
      %v2081 = vpop.permute.xlu0 %2080
      %2084 = vset.pattern.permute.xlu0 0
      %2085 = vperm.xlu0 %2084, %v1945
      %v2086 = vpop.permute.xlu0 %2085
      %2089 = vset.pattern.permute.xlu0 0
      %2090 = vperm.xlu0 %2089, %v1950
      %v2091 = vpop.permute.xlu0 %2090
      %2094 = vset.pattern.permute.xlu0 0
      %2095 = vperm.xlu0 %2094, %v1955
      %v2096 = vpop.permute.xlu0 %2095
      %2099 = vset.pattern.permute.xlu0 0
      %2100 = vperm.xlu0 %2099, %v1960
      %v2101 = vpop.permute.xlu0 %2100
      %2104 = vset.pattern.permute.xlu0 0
      %2105 = vperm.xlu0 %2104, %v1965
      %v2106 = vpop.permute.xlu0 %2105
      %2109 = vset.pattern.permute.xlu0 0
      %2110 = vperm.xlu0 %2109, %v1970
      %v2111 = vpop.permute.xlu0 %2110
      %2114 = vset.pattern.permute.xlu0 0
      %2115 = vperm.xlu0 %2114, %v1975
      %v2116 = vpop.permute.xlu0 %2115
      %2119 = vset.pattern.permute.xlu0 0
      %2120 = vperm.xlu0 %2119, %v1980
      %v2121 = vpop.permute.xlu0 %2120
      %2124 = vset.pattern.permute.xlu0 0
      %2125 = vperm.xlu0 %2124, %v1985
      %v2126 = vpop.permute.xlu0 %2125
      %2129 = vset.pattern.permute.xlu0 0
      %2130 = vperm.xlu0 %2129, %v1990
      %v2131 = vpop.permute.xlu0 %2130
      %2134 = vset.pattern.permute.xlu0 0
      %2135 = vperm.xlu0 %2134, %v1995
      %v2136 = vpop.permute.xlu0 %2135
      %2139 = vset.pattern.permute.xlu0 0
      %2140 = vperm.xlu0 %2139, %v2000
      %v2141 = vpop.permute.xlu0 %2140
      %2144 = vset.pattern.permute.xlu0 0
      %2145 = vperm.xlu0 %2144, %v2005
      %v2146 = vpop.permute.xlu0 %2145
      %2149 = vset.pattern.permute.xlu0 0
      %2150 = vperm.xlu0 %2149, %v2010
      %v2151 = vpop.permute.xlu0 %2150
      %2154 = vset.pattern.permute.xlu0 0
      %2155 = vperm.xlu0 %2154, %v2015
      %v2156 = vpop.permute.xlu0 %2155
      %2159 = vset.pattern.permute.xlu0 0
      %2160 = vperm.xlu0 %2159, %v2020
      %v2161 = vpop.permute.xlu0 %2160
      %2164 = vset.pattern.permute.xlu0 0
      %2165 = vperm.xlu0 %2164, %v2025
      %v2166 = vpop.permute.xlu0 %2165
      %2169 = vset.pattern.permute.xlu0 0
      %2170 = vperm.xlu0 %2169, %v2030
      %v2171 = vpop.permute.xlu0 %2170
      %2174 = vset.pattern.permute.xlu0 0
      %2175 = vperm.xlu0 %2174, %v2035
      %v2176 = vpop.permute.xlu0 %2175
      %2179 = vset.pattern.permute.xlu0 0
      %2180 = vperm.xlu0 %2179, %v2040
      %v2181 = vpop.permute.xlu0 %2180
      %v2183 = vmul.f32 %v629, %v2046
      %v2184 = vmul.f32 %v634, %v2051
      %v2185 = vmul.f32 %v639, %v2056
      %v2186 = vmul.f32 %v644, %v2061
      %v2187 = vmul.f32 %v649, %v2066
      %v2188 = vmul.f32 %v654, %v2071
      %v2189 = vmul.f32 %v659, %v2076
      %v2190 = vmul.f32 %v664, %v2081
      %v2191 = vmul.f32 %v669, %v2086
      %v2192 = vmul.f32 %v674, %v2091
      %v2193 = vmul.f32 %v679, %v2096
      %v2194 = vmul.f32 %v684, %v2101
      %v2195 = vmul.f32 %v689, %v2106
      %v2196 = vmul.f32 %v694, %v2111
      %v2197 = vmul.f32 %v699, %v2116
      %v2198 = vmul.f32 %v704, %v2121
      %v2199 = vmul.f32 %v709, %v2126
      %v2200 = vmul.f32 %v714, %v2131
      %v2201 = vmul.f32 %v719, %v2136
      %v2202 = vmul.f32 %v724, %v2141
      %v2203 = vmul.f32 %v729, %v2146
      %v2204 = vmul.f32 %v734, %v2151
      %v2205 = vmul.f32 %v739, %v2156
      %v2206 = vmul.f32 %v744, %v2161
      %v2207 = vmul.f32 %v749, %v2166
      %v2208 = vmul.f32 %v754, %v2171
      %v2209 = vmul.f32 %v759, %v2176
      %v2210 = vmul.f32 %v764, %v2181
      %v2211 = vmax.f32 %v2183, -100.0
      %v2212 = vmax.f32 %v2184, -100.0
      %v2213 = vmax.f32 %v2185, -100.0
      %v2214 = vmax.f32 %v2186, -100.0
      %v2215 = vmax.f32 %v2187, -100.0
      %v2216 = vmax.f32 %v2188, -100.0
      %v2217 = vmax.f32 %v2189, -100.0
      %v2218 = vmax.f32 %v2190, -100.0
      %v2219 = vmax.f32 %v2191, -100.0
      %v2220 = vmax.f32 %v2192, -100.0
      %v2221 = vmax.f32 %v2193, -100.0
      %v2222 = vmax.f32 %v2194, -100.0
      %v2223 = vmax.f32 %v2195, -100.0
      %v2224 = vmax.f32 %v2196, -100.0
      %v2225 = vmax.f32 %v2197, -100.0
      %v2226 = vmax.f32 %v2198, -100.0
      %v2227 = vmax.f32 %v2199, -100.0
      %v2228 = vmax.f32 %v2200, -100.0
      %v2229 = vmax.f32 %v2201, -100.0
      %v2230 = vmax.f32 %v2202, -100.0
      %v2231 = vmax.f32 %v2203, -100.0
      %v2232 = vmax.f32 %v2204, -100.0
      %v2233 = vmax.f32 %v2205, -100.0
      %v2234 = vmax.f32 %v2206, -100.0
      %v2235 = vmax.f32 %v2207, -100.0
      %v2236 = vmax.f32 %v2208, -100.0
      %v2237 = vmax.f32 %v2209, -100.0
      %v2238 = vmax.f32 %v2210, -100.0
      %v2239 = vmin.f32 %v2211, 100.0
      %v2240 = vmin.f32 %v2212, 100.0
      %v2241 = vmin.f32 %v2213, 100.0
      %v2242 = vmin.f32 %v2214, 100.0
      %v2243 = vmin.f32 %v2215, 100.0
      %v2244 = vmin.f32 %v2216, 100.0
      %v2245 = vmin.f32 %v2217, 100.0
      %v2246 = vmin.f32 %v2218, 100.0
      %v2247 = vmin.f32 %v2219, 100.0
      %v2248 = vmin.f32 %v2220, 100.0
      %v2249 = vmin.f32 %v2221, 100.0
      %v2250 = vmin.f32 %v2222, 100.0
      %v2251 = vmin.f32 %v2223, 100.0
      %v2252 = vmin.f32 %v2224, 100.0
      %v2253 = vmin.f32 %v2225, 100.0
      %v2254 = vmin.f32 %v2226, 100.0
      %v2255 = vmin.f32 %v2227, 100.0
      %v2256 = vmin.f32 %v2228, 100.0
      %v2257 = vmin.f32 %v2229, 100.0
      %v2258 = vmin.f32 %v2230, 100.0
      %v2259 = vmin.f32 %v2231, 100.0
      %v2260 = vmin.f32 %v2232, 100.0
      %v2261 = vmin.f32 %v2233, 100.0
      %v2262 = vmin.f32 %v2234, 100.0
      %v2263 = vmin.f32 %v2235, 100.0
      %v2264 = vmin.f32 %v2236, 100.0
      %v2265 = vmin.f32 %v2237, 100.0
      %v2266 = vmin.f32 %v2238, 100.0
      %v2267 = vsel %vm319, %v1405, %v2239
      %v2268 = vsel %vm319, %v1406, %v2240
      %v2269 = vsel %vm319, %v1407, %v2241
      %v2270 = vsel %vm319, %v1408, %v2242
      %v2271 = vsel %vm319, %v1409, %v2243
      %v2272 = vsel %vm319, %v1410, %v2244
      %v2273 = vsel %vm319, %v1411, %v2245
      %v2274 = vsel %vm319, %v1412, %v2246
      %v2275 = vsel %vm319, %v1413, %v2247
      %v2276 = vsel %vm319, %v1414, %v2248
      %v2277 = vsel %vm319, %v1415, %v2249
      %v2278 = vsel %vm319, %v1416, %v2250
      %v2279 = vsel %vm319, %v1417, %v2251
      %v2280 = vsel %vm319, %v1418, %v2252
      %v2281 = vsel %vm319, %v1419, %v2253
      %v2282 = vsel %vm319, %v1420, %v2254
      %v2283 = vsel %vm319, %v1421, %v2255
      %v2284 = vsel %vm319, %v1422, %v2256
      %v2285 = vsel %vm319, %v1423, %v2257
      %v2286 = vsel %vm319, %v1424, %v2258
      %v2287 = vsel %vm319, %v1425, %v2259
      %v2288 = vsel %vm319, %v1426, %v2260
      %v2289 = vsel %vm319, %v1427, %v2261
      %v2290 = vsel %vm319, %v1428, %v2262
      %v2291 = vsel %vm319, %v1429, %v2263
      %v2292 = vsel %vm319, %v1430, %v2264
      %v2293 = vsel %vm319, %v1431, %v2265
      %v2294 = vsel %vm319, %v1432, %v2266
      %vm2295 = vcmask 285696
      %v2296 = vsel %vm2295, %v2267, 1.0
      %v2297 = vsel %vm2295, %v2268, 1.0
      %v2298 = vsel %vm2295, %v2269, 1.0
      %v2299 = vsel %vm2295, %v2270, 1.0
      %v2300 = vsel %vm2295, %v2271, 1.0
      %v2301 = vsel %vm2295, %v2272, 1.0
      %v2302 = vsel %vm2295, %v2273, 1.0
      %v2303 = vsel %vm2295, %v2274, 1.0
      %v2304 = vsel %vm2295, %v2275, 1.0
      %v2305 = vsel %vm2295, %v2276, 1.0
      %v2306 = vsel %vm2295, %v2277, 1.0
      %v2307 = vsel %vm2295, %v2278, 1.0
      %v2308 = vsel %vm2295, %v2279, 1.0
      %v2309 = vsel %vm2295, %v2280, 1.0
      %v2310 = vsel %vm2295, %v2281, 1.0
      %v2311 = vsel %vm2295, %v2282, 1.0
      %v2312 = vsel %vm2295, %v2283, 1.0
      %v2313 = vsel %vm2295, %v2284, 1.0
      %v2314 = vsel %vm2295, %v2285, 1.0
      %v2315 = vsel %vm2295, %v2286, 1.0
      %v2316 = vsel %vm2295, %v2287, 1.0
      %v2317 = vsel %vm2295, %v2288, 1.0
      %v2318 = vsel %vm2295, %v2289, 1.0
      %v2319 = vsel %vm2295, %v2290, 1.0
      %v2320 = vsel %vm2295, %v2291, 1.0
      %v2321 = vsel %vm2295, %v2292, 1.0
      %v2322 = vsel %vm2295, %v2293, 1.0
      %v2323 = vsel %vm2295, %v2294, 1.0
      %vm2324 = vcmask 785408
      %v2326 = vsel %vm2324, %v282, 0
      %v2329 = vsel %vm2324, %v284, 0
      %v2332 = vsel %vm2324, %v286, 0
      %v2335 = vsel %vm2324, %v288, 0
      %2337 = vmatprep.subr.mxu0 0.0
      %2338 = vmatpush1.msra.mxu0 %v2311
      %2339 = vmatprep.subr.mxu0 0.0
      %2340 = vmatpush1.msra.mxu0 %v2310
      %2341 = vmatprep.subr.mxu0 0.0
      %2342 = vmatpush1.msra.mxu0 %v2309
      %2343 = vmatprep.subr.mxu0 0.0
      %2344 = vmatpush1.msra.mxu0 %v2308
      %2345 = vmatprep.subr.mxu0 0.0
      %2346 = vmatpush1.msra.mxu0 %v2307
      %2347 = vmatprep.subr.mxu0 0.0
      %2348 = vmatpush1.msra.mxu0 %v2306
      %2349 = vmatprep.subr.mxu0 0.0
      %2350 = vmatpush1.msra.mxu0 %v2305
      %2351 = vmatprep.subr.mxu0 0.0
      %2352 = vmatpush1.msra.mxu0 %v2304
      %2353 = vmatprep.subr.mxu0 0.0
      %2354 = vmatpush1.msra.mxu0 %v2303
      %2355 = vmatprep.subr.mxu0 0.0
      %2356 = vmatpush1.msra.mxu0 %v2302
      %2357 = vmatprep.subr.mxu0 0.0
      %2358 = vmatpush1.msra.mxu0 %v2301
      %2359 = vmatprep.subr.mxu0 0.0
      %2360 = vmatpush1.msra.mxu0 %v2300
      %2361 = vmatprep.subr.mxu0 0.0
      %2362 = vmatpush1.msra.mxu0 %v2299
      %2363 = vmatprep.subr.mxu0 0.0
      %2364 = vmatpush1.msra.mxu0 %v2298
      %2365 = vmatprep.subr.mxu0 0.0
      %2366 = vmatpush1.msra.mxu0 %v2297
      %2367 = vmatprep.subr.mxu0 0.0
      %2368 = vmatpush1.msra.mxu0 %v2296
      %2369 = vmatprep.subr.mxu0 0.0
      %2370 = vmatpush2.msra.mxu0 0.0
      %2371 = vmatprep.subr.mxu0 0.0
      %2372 = vmatpush2.msra.mxu0 0.0
      %2373 = vmatprep.subr.mxu0 0.0
      %2374 = vmatpush2.msra.mxu0 0.0
      %2375 = vmatprep.subr.mxu0 0.0
      %2376 = vmatpush2.msra.mxu0 0.0
      %2377 = vmatprep.subr.mxu0 0.0
      %2378 = vmatpush2.msra.mxu0 %v2323
      %2379 = vmatprep.subr.mxu0 0.0
      %2380 = vmatpush2.msra.mxu0 %v2322
      %2381 = vmatprep.subr.mxu0 0.0
      %2382 = vmatpush2.msra.mxu0 %v2321
      %2383 = vmatprep.subr.mxu0 0.0
      %2384 = vmatpush2.msra.mxu0 %v2320
      %2385 = vmatprep.subr.mxu0 0.0
      %2386 = vmatpush2.msra.mxu0 %v2319
      %2387 = vmatprep.subr.mxu0 0.0
      %2388 = vmatpush2.msra.mxu0 %v2318
      %2389 = vmatprep.subr.mxu0 0.0
      %2390 = vmatpush2.msra.mxu0 %v2317
      %2391 = vmatprep.subr.mxu0 0.0
      %2392 = vmatpush2.msra.mxu0 %v2316
      %2393 = vmatprep.subr.mxu0 0.0
      %2394 = vmatpush2.msra.mxu0 %v2315
      %2395 = vmatprep.subr.mxu0 0.0
      %2396 = vmatpush2.msra.mxu0 %v2314
      %2397 = vmatprep.subr.mxu0 0.0
      %2398 = vmatpush2.msra.mxu0 %v2313
      %2399 = vmatprep.subr.mxu0 0.0
      %2400 = vmatpush2.msra.mxu0 %v2312
      %2401 = vmatprep.mubr.f32.mxu0 %v2326
      %2402 = vmatmul.mubr.f32.gmra.mxu0 %v281
      %v2403 = vpop.f32.mrf.mxu0
      %v2404 = vadd.f32 0.0, %v2403
      %v2405 = vpop.f32.mrf.mxu0
      %2406 = vmatprep.mubr.f32.mxu0 %v2329
      %2407 = vmatmul.mubr.f32.gmra.mxu0 %v283
      %v2408 = vpop.f32.mrf.mxu0
      %v2409 = vadd.f32 0.0, %v2408
      %v2410 = vpop.f32.mrf.mxu0
      %2411 = vmatprep.mubr.f32.mxu0 %v2332
      %2412 = vmatmul.mubr.f32.gmra.mxu0 %v285
      %v2413 = vpop.f32.mrf.mxu0
      %v2414 = vadd.f32 0.0, %v2413
      %v2415 = vpop.f32.mrf.mxu0
      %2416 = vmatprep.mubr.f32.mxu0 %v2335
      %2417 = vmatmul.mubr.f32.gmra.mxu0 %v287
      %v2418 = vpop.f32.mrf.mxu0
      %v2419 = vadd.f32 0.0, %v2418
      %v2420 = vpop.f32.mrf.mxu0
      %2421 = vdwg.mxu0
      %v2422 = vmax.f32 %v2404, 1.0
      %v2423 = vmax.f32 %v2409, 1.0
      %v2424 = vmax.f32 %v2414, 1.0
      %v2425 = vmax.f32 %v2419, 1.0
      %2427 = vset.pattern.permute.xlu0 35
      %2428 = vperm.xlu0 %2427, %v2422
      %v2429 = vpop.permute.xlu0 %2428
      %2432 = vset.pattern.permute.xlu0 35
      %2433 = vperm.xlu0 %2432, %v2423
      %v2434 = vpop.permute.xlu0 %2433
      %2437 = vset.pattern.permute.xlu0 35
      %2438 = vperm.xlu0 %2437, %v2424
      %v2439 = vpop.permute.xlu0 %2438
      %2442 = vset.pattern.permute.xlu0 35
      %2443 = vperm.xlu0 %2442, %v2425
      %v2444 = vpop.permute.xlu0 %2443
      %v2446 = vrcp.pop %v2429
      %v2447 = vmul.f32 %v2404, %v2446
      %v2448 = vrcp.pop %v2434
      %v2449 = vmul.f32 %v2409, %v2448
      %v2450 = vrcp.pop %v2439
      %v2451 = vmul.f32 %v2414, %v2450
      %v2452 = vrcp.pop %v2444
      %v2453 = vmul.f32 %v2419, %v2452
      %2458 = vrot.lane.b32.xlu0 %v2447, 96
      %v2459 = vpop.permute.xlu0 %2458
      %2460 = vrot.lane.b32.xlu0 %v2449, 96
      %v2461 = vpop.permute.xlu0 %2460
      %2462 = vrot.lane.b32.xlu0 %v2451, 96
      %v2463 = vpop.permute.xlu0 %2462
      %2464 = vrot.lane.b32.xlu0 %v2453, 96
      %v2465 = vpop.permute.xlu0 %2464
      %v2470 = vadd.f32 %v249, %v2459
      %v2471 = vadd.f32 %v250, %v2461
      %v2472 = vadd.f32 %v251, %v2463
      %v2473 = vadd.f32 %v252, %v2465
      %v2475 = vsel %vm319, %v2404, 0
      %v2478 = vsel %vm319, %v2409, 0
      %v2481 = vsel %vm319, %v2414, 0
      %v2484 = vsel %vm319, %v2419, 0
      %2486 = vmatprep.subr.mxu0 0.0
      %2487 = vmatpush1.msra.mxu0 0.0
      %2488 = vmatprep.subr.mxu0 0.0
      %2489 = vmatpush1.msra.mxu0 0.0
      %2490 = vmatprep.subr.mxu0 0.0
      %2491 = vmatpush1.msra.mxu0 0.0
      %2492 = vmatprep.subr.mxu0 0.0
      %2493 = vmatpush1.msra.mxu0 0.0
      %2494 = vmatprep.subr.mxu0 0.0
      %2495 = vmatpush1.msra.mxu0 0.0
      %2496 = vmatprep.subr.mxu0 0.0
      %2497 = vmatpush1.msra.mxu0 0.0
      %2498 = vmatprep.subr.mxu0 0.0
      %2499 = vmatpush1.msra.mxu0 0.0
      %2500 = vmatprep.subr.mxu0 0.0
      %2501 = vmatpush1.msra.mxu0 0.0
      %2502 = vmatprep.subr.mxu0 0.0
      %2503 = vmatpush1.msra.mxu0 0.0
      %2504 = vmatprep.subr.mxu0 0.0
      %2505 = vmatpush1.msra.mxu0 0.0
      %2506 = vmatprep.subr.mxu0 0.0
      %2507 = vmatpush1.msra.mxu0 0.0
      %2508 = vmatprep.subr.mxu0 0.0
      %2509 = vmatpush1.msra.mxu0 0.0
      %2510 = vmatprep.subr.mxu0 0.0
      %2511 = vmatpush1.msra.mxu0 %v304
      %2512 = vmatprep.subr.mxu0 0.0
      %2513 = vmatpush1.msra.mxu0 %v303
      %2514 = vmatprep.subr.mxu0 0.0
      %2515 = vmatpush1.msra.mxu0 %v302
      %2516 = vmatprep.subr.mxu0 0.0
      %2517 = vmatpush1.msra.mxu0 %v301
      %2518 = vmatprep.subr.mxu0 0.0
      %2519 = vmatpush2.msra.mxu0 0.0
      %2520 = vmatprep.subr.mxu0 0.0
      %2521 = vmatpush2.msra.mxu0 0.0
      %2522 = vmatprep.subr.mxu0 0.0
      %2523 = vmatpush2.msra.mxu0 0.0
      %2524 = vmatprep.subr.mxu0 0.0
      %2525 = vmatpush2.msra.mxu0 0.0
      %2526 = vmatprep.subr.mxu0 0.0
      %2527 = vmatpush2.msra.mxu0 0.0
      %2528 = vmatprep.subr.mxu0 0.0
      %2529 = vmatpush2.msra.mxu0 0.0
      %2530 = vmatprep.subr.mxu0 0.0
      %2531 = vmatpush2.msra.mxu0 0.0
      %2532 = vmatprep.subr.mxu0 0.0
      %2533 = vmatpush2.msra.mxu0 0.0
      %2534 = vmatprep.subr.mxu0 0.0
      %2535 = vmatpush2.msra.mxu0 0.0
      %2536 = vmatprep.subr.mxu0 0.0
      %2537 = vmatpush2.msra.mxu0 0.0
      %2538 = vmatprep.subr.mxu0 0.0
      %2539 = vmatpush2.msra.mxu0 0.0
      %2540 = vmatprep.subr.mxu0 0.0
      %2541 = vmatpush2.msra.mxu0 0.0
      %2542 = vmatprep.subr.mxu0 0.0
      %2543 = vmatpush2.msra.mxu0 0.0
      %2544 = vmatprep.subr.mxu0 0.0
      %2545 = vmatpush2.msra.mxu0 0.0
      %2546 = vmatprep.subr.mxu0 0.0
      %2547 = vmatpush2.msra.mxu0 0.0
      %2548 = vmatprep.subr.mxu0 0.0
      %2549 = vmatpush2.msra.mxu0 0.0
      %2550 = vmatprep.mubr.f32.mxu0 0.0
      %2551 = vmatmul.mubr.f32.gmra.mxu0 %v2475
      %v2552 = vpop.f32.mrf.mxu0
      %v2553 = vadd.f32 0.0, %v2552
      %v2554 = vpop.f32.mrf.mxu0
      %2555 = vmatprep.mubr.f32.mxu0 0.0
      %2556 = vmatmul.mubr.f32.gmra.mxu0 %v2478
      %v2557 = vpop.f32.mrf.mxu0
      %v2558 = vadd.f32 0.0, %v2557
      %v2559 = vpop.f32.mrf.mxu0
      %2560 = vmatprep.mubr.f32.mxu0 0.0
      %2561 = vmatmul.mubr.f32.gmra.mxu0 %v2481
      %v2562 = vpop.f32.mrf.mxu0
      %v2563 = vadd.f32 0.0, %v2562
      %v2564 = vpop.f32.mrf.mxu0
      %2565 = vmatprep.mubr.f32.mxu0 0.0
      %2566 = vmatmul.mubr.f32.gmra.mxu0 %v2484
      %v2567 = vpop.f32.mrf.mxu0
      %v2568 = vadd.f32 0.0, %v2567
      %v2569 = vpop.f32.mrf.mxu0
      %2570 = vdwg.mxu0
      %2575 = vrot.lane.b32.xlu0 %v2553, 64
      %v2576 = vpop.permute.xlu0 %2575
      %2577 = vrot.lane.b32.xlu0 %v2558, 64
      %v2578 = vpop.permute.xlu0 %2577
      %2579 = vrot.lane.b32.xlu0 %v2563, 64
      %v2580 = vpop.permute.xlu0 %2579
      %2581 = vrot.lane.b32.xlu0 %v2568, 64
      %v2582 = vpop.permute.xlu0 %2581
      %v2587 = vadd.f32 %v399, %v2576
      %v2588 = vadd.f32 %v404, %v2578
      %v2589 = vadd.f32 %v409, %v2580
      %v2590 = vadd.f32 %v414, %v2582
      %v2591 = vlaneseq
      %v2592 = vshrl.u32 %v2591, 7
      %v2593 = vsub.s32 0, %v2592
      %v2594 = vrot.slane %v317, %v2593
      %2596 = vrot.lane.b32.xlu0 %v2594, 64
      %v2597 = vpop.permute.xlu0 %2596
      %v2599 = vadd.f32 %v2587, %v2597
      %v2600 = vadd.f32 %v2588, %v2597
      %v2601 = vadd.f32 %v2589, %v2597
      %v2602 = vadd.f32 %v2590, %v2597
      %v2603 = vmax.f32 %v2599, 0.0
      %v2604 = vmax.f32 %v2600, 0.0
      %v2605 = vmax.f32 %v2601, 0.0
      %v2606 = vmax.f32 %v2602, 0.0
      %v2607 = vlaneseq
      %v2608 = vshrl.u32 %v2607, 7
      %v2609 = vsub.s32 0, %v2608
      %v2610 = vrot.slane %v318, %v2609
      %2615 = vrot.lane.b32.xlu0 %v2603, 64
      %v2616 = vpop.permute.xlu0 %2615
      %2617 = vrot.lane.b32.xlu0 %v2604, 64
      %v2618 = vpop.permute.xlu0 %2617
      %2619 = vrot.lane.b32.xlu0 %v2605, 64
      %v2620 = vpop.permute.xlu0 %2619
      %2621 = vrot.lane.b32.xlu0 %v2606, 64
      %v2622 = vpop.permute.xlu0 %2621
      %v2623 = vsel %vm319, %v2616, 0
      %v2625 = vsel %vm319, %v2618, 0
      %v2627 = vsel %vm319, %v2620, 0
      %v2629 = vsel %vm319, %v2622, 0
      %2631 = vmatprep.subr.mxu0 0.0
      %2632 = vmatpush1.msra.mxu0 0.0
      %2633 = vmatprep.subr.mxu0 0.0
      %2634 = vmatpush1.msra.mxu0 0.0
      %2635 = vmatprep.subr.mxu0 0.0
      %2636 = vmatpush1.msra.mxu0 0.0
      %2637 = vmatprep.subr.mxu0 0.0
      %2638 = vmatpush1.msra.mxu0 0.0
      %2639 = vmatprep.subr.mxu0 0.0
      %2640 = vmatpush1.msra.mxu0 0.0
      %2641 = vmatprep.subr.mxu0 0.0
      %2642 = vmatpush1.msra.mxu0 0.0
      %2643 = vmatprep.subr.mxu0 0.0
      %2644 = vmatpush1.msra.mxu0 0.0
      %2645 = vmatprep.subr.mxu0 0.0
      %2646 = vmatpush1.msra.mxu0 0.0
      %2647 = vmatprep.subr.mxu0 0.0
      %2648 = vmatpush1.msra.mxu0 0.0
      %2649 = vmatprep.subr.mxu0 0.0
      %2650 = vmatpush1.msra.mxu0 0.0
      %2651 = vmatprep.subr.mxu0 0.0
      %2652 = vmatpush1.msra.mxu0 0.0
      %2653 = vmatprep.subr.mxu0 0.0
      %2654 = vmatpush1.msra.mxu0 0.0
      %2655 = vmatprep.subr.mxu0 0.0
      %2656 = vmatpush1.msra.mxu0 %v308
      %2657 = vmatprep.subr.mxu0 0.0
      %2658 = vmatpush1.msra.mxu0 %v307
      %2659 = vmatprep.subr.mxu0 0.0
      %2660 = vmatpush1.msra.mxu0 %v306
      %2661 = vmatprep.subr.mxu0 0.0
      %2662 = vmatpush1.msra.mxu0 %v305
      %2663 = vmatprep.subr.mxu0 0.0
      %2664 = vmatpush2.msra.mxu0 0.0
      %2665 = vmatprep.subr.mxu0 0.0
      %2666 = vmatpush2.msra.mxu0 0.0
      %2667 = vmatprep.subr.mxu0 0.0
      %2668 = vmatpush2.msra.mxu0 0.0
      %2669 = vmatprep.subr.mxu0 0.0
      %2670 = vmatpush2.msra.mxu0 0.0
      %2671 = vmatprep.subr.mxu0 0.0
      %2672 = vmatpush2.msra.mxu0 0.0
      %2673 = vmatprep.subr.mxu0 0.0
      %2674 = vmatpush2.msra.mxu0 0.0
      %2675 = vmatprep.subr.mxu0 0.0
      %2676 = vmatpush2.msra.mxu0 0.0
      %2677 = vmatprep.subr.mxu0 0.0
      %2678 = vmatpush2.msra.mxu0 0.0
      %2679 = vmatprep.subr.mxu0 0.0
      %2680 = vmatpush2.msra.mxu0 0.0
      %2681 = vmatprep.subr.mxu0 0.0
      %2682 = vmatpush2.msra.mxu0 0.0
      %2683 = vmatprep.subr.mxu0 0.0
      %2684 = vmatpush2.msra.mxu0 0.0
      %2685 = vmatprep.subr.mxu0 0.0
      %2686 = vmatpush2.msra.mxu0 0.0
      %2687 = vmatprep.subr.mxu0 0.0
      %2688 = vmatpush2.msra.mxu0 0.0
      %2689 = vmatprep.subr.mxu0 0.0
      %2690 = vmatpush2.msra.mxu0 0.0
      %2691 = vmatprep.subr.mxu0 0.0
      %2692 = vmatpush2.msra.mxu0 0.0
      %2693 = vmatprep.subr.mxu0 0.0
      %2694 = vmatpush2.msra.mxu0 0.0
      %2695 = vmatprep.mubr.f32.mxu0 0.0
      %2696 = vmatmul.mubr.f32.gmra.mxu0 %v2623
      %v2697 = vpop.f32.mrf.mxu0
      %v2698 = vadd.f32 %v2610, %v2697
      %v2699 = vpop.f32.mrf.mxu0
      %2700 = vmatprep.mubr.f32.mxu0 0.0
      %2701 = vmatmul.mubr.f32.gmra.mxu0 %v2625
      %v2702 = vpop.f32.mrf.mxu0
      %v2703 = vadd.f32 %v2610, %v2702
      %v2704 = vpop.f32.mrf.mxu0
      %2705 = vmatprep.mubr.f32.mxu0 0.0
      %2706 = vmatmul.mubr.f32.gmra.mxu0 %v2627
      %v2707 = vpop.f32.mrf.mxu0
      %v2708 = vadd.f32 %v2610, %v2707
      %v2709 = vpop.f32.mrf.mxu0
      %2710 = vmatprep.mubr.f32.mxu0 0.0
      %2711 = vmatmul.mubr.f32.gmra.mxu0 %v2629
      %v2712 = vpop.f32.mrf.mxu0
      %v2713 = vadd.f32 %v2610, %v2712
      %v2714 = vpop.f32.mrf.mxu0
      %2715 = vdwg.mxu0
      %v2716 = vadd.f32 %v245, %v2698
      %v2717 = vadd.f32 %v246, %v2703
      %v2718 = vadd.f32 %v247, %v2708
      %v2719 = vadd.f32 %v248, %v2713
      %2724 = vrot.lane.b32.xlu0 %v2470, 32
      %v2725 = vpop.permute.xlu0 %2724
      %2726 = vrot.lane.b32.xlu0 %v2471, 32
      %v2727 = vpop.permute.xlu0 %2726
      %2728 = vrot.lane.b32.xlu0 %v2472, 32
      %v2729 = vpop.permute.xlu0 %2728
      %2730 = vrot.lane.b32.xlu0 %v2473, 32
      %v2731 = vpop.permute.xlu0 %2730
      %v2736 = vsel %vm319, %v2716, %v2725
      %v2737 = vsel %vm319, %v2717, %v2727
      %v2738 = vsel %vm319, %v2718, %v2729
      %v2739 = vsel %vm319, %v2719, %v2731
      %2740 = vst.msk [vmem:[%s244] sm:$0xff] %vm2295, %v2736
      %2741 = vst.msk [vmem:[%s244 + $0x8] sm:$0xff] %vm2295, %v2737
      %2742 = vst.msk [vmem:[%s244 + $0x10] sm:$0xff] %vm2295, %v2738
      %2743 = vst.msk [vmem:[%s244 + $0x18] sm:$0xff] %vm2295, %v2739
      %p2744 = scmp.lt.s32.totalorder %s16, 1
      %s2745 = scalar_select %p2744, %s16, 1
      %s2746 = smul.addr %s2745, 4
      %s2747 = smul.addr %s2746, 8
      %s2748 = scalar_lea.vmem %s5, %s2747
      // Predicated region
      $region41: #{egcl_forward.1} parent=39 // pred_check
        %p2749 = pneg %p149
      $region42: #{egcl_forward.1} parent=39 // pred_check_branch
        %2751 = sbr.rel (%p2749) target = $region44
      $region43: #{egcl_forward.1} parent=39 // pred_region
        _
      $region44: #{egcl_forward.1} parent=39 // pred_fallthru
        _
    $region40: #{egcl_forward.1} parent=5 // pred_fallthru
      _
    %p2752 = scmp.le.s32.totalorder 2, %s11
    // Predicated region
    $region45: #{egcl_forward.1} parent=5 // pred_check
      %p2753 = pneg %p2752
    $region46: #{egcl_forward.1} parent=5 // pred_check_branch
      %2755 = sbr.rel (%p2753) target = $region48
    $region47: #{egcl_forward.1} parent=5 // pred_region
      %s2756 = ssub.s32 %s11, 2
      // Predicated region
      $region49: #{egcl_forward.1} parent=47 // pred_check
        %p2757 = pneg %p155
      $region50: #{egcl_forward.1} parent=47 // pred_check_branch
        %2759 = sbr.rel (%p2757) target = $region52
      $region51: #{egcl_forward.1} parent=47 // pred_region
        %p2760 = scmp.lt.s32.totalorder %s17, 1
        %s2761 = scalar_select %p2760, %s17, 1
        %s2762 = smul.addr %s2761, 4
        %s2763 = smul.addr %s2762, 8
        %s2764 = scalar_lea.vmem %s5, %s2763
      $region52: #{egcl_forward.1} parent=47 // pred_fallthru
        _
    $region48: #{egcl_forward.1} parent=5 // pred_fallthru
      _
  $region6: #{egcl_forward.1} parent=0 // loop_footer
    %s15 = sadd.s32 1, %s11
  $region7: #{egcl_forward.1} parent=0 // loop_footer_branch
    %10 = sbr.rel target = $region3
  $region8: #{egcl_forward.1} parent=0 // loop_exit
    _

</llo_original>
